<compile_context>
chip_gen: v7x
topology: tpu7x:2x2x1
jax: 0.10.0
libtpu: 0.0.40
codegen_flags: <defaults>
</compile_context>

<pallas_src>
import functools

import numpy as np
import jax
import jax.numpy as jnp
from jax.experimental import pallas as pl
from jax.experimental.pallas import tpu as pltpu


F_PAD = 128   # padded dim_feat (lane-dense hidden width)
C_PAD = 128   # padded (num_classes + dim_embed) combined head output width

_PARAMS = pltpu.CompilerParams(
    dimension_semantics=("parallel",),
    vmem_limit_bytes=32 * 1024 * 1024,   # raise v5e's 16 MiB default; safe on v7x
)


# ----------------------------------------------------------------------------
# Tiling helpers
# ----------------------------------------------------------------------------

def _choose_row_tile(m, target=512):
    """Largest row tile <= target that divides m, multiple of 8, and leaves
    >= 2 grid steps when possible (v7x dual TensorCore)."""
    if m % 8 != 0:
        return m                      # single full block (still legal)
    cap = min(target, m)
    if m >= 16:
        cap = min(cap, m // 2)
    cap = max(cap, 8)
    best = 8
    for t in range(8, cap + 1, 8):
        if m % t == 0:
            best = t
    return best


def _choose_batch_tile(b, target=8):
    t = min(target, b)
    while b % t != 0:
        t -= 1
    return max(t, 1)


# ----------------------------------------------------------------------------
# Kernel 1: fused backbone-head + classifier + projection + L2 normalize
#   x (tm, Cin) bf16  -> combined (tm, C_PAD) f32
#   lanes [0, nc)           : classifier logits
#   lanes [nc, nc+dim_embed): L2-normalized projection
#   remaining lanes         : exactly zero
# ----------------------------------------------------------------------------

def _fused_head_kernel(x_ref, wbb_ref, bbsh_ref, wfeat_ref, shh_ref, wp2_ref,
                       o_ref):
    fdim = wp2_ref.shape[0]                                   # = F_PAD
    # backbone: 1x1 conv (BN scale folded into weight) + shift + ReLU
    feat = jnp.dot(x_ref[...], wbb_ref[...],
                   preferred_element_type=jnp.float32)
    feat = jnp.maximum(feat + bbsh_ref[...], 0.0).astype(jnp.bfloat16)
    # one matmul produces [projection-hidden | classifier-logits]
    t = jnp.dot(feat, wfeat_ref[...],
                preferred_element_type=jnp.float32) + shh_ref[...]
    hid = jnp.maximum(t[:, :fdim], 0.0).astype(jnp.bfloat16)  # proj hidden
    logits = t[:, fdim:]                                       # padded logits
    # projection output (placed in lanes [nc, nc+dim_embed) by weight packing)
    proj = jnp.dot(hid, wp2_ref[...], preferred_element_type=jnp.float32)
    # F.normalize(p=2, dim=channel): 1 / max(||p||, 1e-12) == rsqrt(max(ss,1e-24))
    sumsq = jnp.sum(proj * proj, axis=-1, keepdims=True)
    inv = jax.lax.rsqrt(jnp.maximum(sumsq, 1e-24))
    o_ref[...] = logits + proj * inv


def fused_head(xf_bf16, p):
    m, cin = xf_bf16.shape
    tm = _choose_row_tile(m)
    wfeat = p["w_feat"]
    return pl.pallas_call(
        _fused_head_kernel,
        out_shape=jax.ShapeDtypeStruct((m, C_PAD), jnp.float32),
        grid=(m // tm,),
        in_specs=[
            pl.BlockSpec((tm, cin), lambda i: (i, 0)),
            pl.BlockSpec(p["w_bb"].shape, lambda i: (0, 0)),
            pl.BlockSpec(p["bb_shift"].shape, lambda i: (0, 0)),
            pl.BlockSpec(wfeat.shape, lambda i: (0, 0)),
            pl.BlockSpec(p["shift_head"].shape, lambda i: (0, 0)),
            pl.BlockSpec(p["w_p2"].shape, lambda i: (0, 0)),
        ],
        out_specs=pl.BlockSpec((tm, C_PAD), lambda i: (i, 0)),
        compiler_params=_PARAMS,
    )(xf_bf16, p["w_bb"], p["bb_shift"], wfeat, p["shift_head"], p["w_p2"])


# ----------------------------------------------------------------------------
# Kernel 2: bilinear H-interpolation  (channels stay on lanes)
#   z (N, Hf, Wf*C) , U_h (H, Hf)  ->  (N, H, Wf*C)
# ----------------------------------------------------------------------------

def _h_interp_kernel(u_ref, y_ref, o_ref):
    o_ref[0] = jnp.dot(u_ref[...], y_ref[0],
                       preferred_element_type=jnp.float32)


def h_interp(z, u_h):
    n, hf, wc = z.shape
    hout = u_h.shape[0]
    return pl.pallas_call(
        _h_interp_kernel,
        out_shape=jax.ShapeDtypeStruct((n, hout, wc), jnp.float32),
        grid=(n,),
        in_specs=[
            pl.BlockSpec((hout, hf), lambda i: (0, 0)),
            pl.BlockSpec((1, hf, wc), lambda i: (i, 0, 0)),
        ],
        out_specs=pl.BlockSpec((1, hout, wc), lambda i: (i, 0, 0)),
        compiler_params=_PARAMS,
    )(u_h, z)


# ----------------------------------------------------------------------------
# Kernel 3: bilinear W-interpolation  (channels stay on lanes)
#   t (N*H, Wf, C) , U_w (W, Wf)  ->  (N*H, W, C)
#   grid over batch tiles; small static unroll of 2-D dots per step.
# ----------------------------------------------------------------------------

def _w_interp_kernel(u_ref, y_ref, o_ref):
    u = u_ref[...]
    for i in range(y_ref.shape[0]):          # static unroll (tb small)
        o_ref[i] = jnp.dot(u, y_ref[i], preferred_element_type=jnp.float32)


def w_interp(t, u_w):
    b, wf, c = t.shape
    wout = u_w.shape[0]
    tb = _choose_batch_tile(b, target=8)
    return pl.pallas_call(
        _w_interp_kernel,
        out_shape=jax.ShapeDtypeStruct((b, wout, c), jnp.float32),
        grid=(b // tb,),
        in_specs=[
            pl.BlockSpec((wout, wf), lambda i: (0, 0)),
            pl.BlockSpec((tb, wf, c), lambda i: (i, 0, 0)),
        ],
        out_specs=pl.BlockSpec((tb, wout, c), lambda i: (i, 0, 0)),
        compiler_params=_PARAMS,
    )(u_w, t)


# ----------------------------------------------------------------------------
# Bilinear (align_corners=False) interpolation matrix
# ----------------------------------------------------------------------------

def bilinear_matrix(out_size, in_size):
    """Row-stochastic U with U @ x == F.interpolate(align_corners=False)."""
    scale = in_size / out_size
    idx = np.arange(out_size, dtype=np.float64)
    src = (idx + 0.5) * scale - 0.5
    src = np.maximum(src, 0.0)                      # PyTorch clamps negatives
    lo = np.minimum(np.floor(src).astype(np.int64), in_size - 1)
    hi = np.minimum(lo + 1, in_size - 1)
    lam = src - lo
    u = np.zeros((out_size, in_size), dtype=np.float32)
    u[np.arange(out_size), lo] += (1.0 - lam).astype(np.float32)
    u[np.arange(out_size), hi] += lam.astype(np.float32)
    return u


# ----------------------------------------------------------------------------
# Full forward: Pallas kernels do the compute; host does only free reshapes,
# the NCHW<->NHWC boundary conversions and the final channel slice.
# ----------------------------------------------------------------------------

def deeplabv3_contrast_forward(x, params):
    n, cin, h, w = x.shape
    nc = params["num_classes"]
    de = params["dim_embed"]

    # synthetic backbone front: stride-2 subsample (== 1x1 conv, stride 2)
    xs = x[:, :, ::2, ::2]                                    # (N, Cin, Hf, Wf)
    hf, wf = xs.shape[2], xs.shape[3]
    xf = jnp.transpose(xs, (0, 2, 3, 1)).reshape(n * hf * wf, cin)
    xf = xf.astype(jnp.bfloat16)

    # fused backbone-head + classifier + projection + L2 normalize
    comb = fused_head(xf, params)                             # (M, C_PAD) f32
    cc = comb.shape[1]

    # bilinear upsample (align_corners=False), logits+proj together,
    # channels kept on the lane axis throughout
    z = comb.reshape(n, hf, wf * cc)                          # free reshape
    t = h_interp(z, params["U_h"])                            # (N, H, Wf*C)
    t = t.reshape(n * h, wf, cc)                              # free reshape
    u = w_interp(t, params["U_w"])                            # (N*H, W, C)
    u = u.reshape(n, h, w, cc)                                # NHWC (padded C)

    # final NCHW conversion (PyTorch module returns NCHW) + channel slice
    out = jnp.transpose(u[..., :nc], (0, 3, 1, 2))
    proj = jnp.transpose(u[..., nc:nc + de], (0, 3, 1, 2))
    return {"out": out, "proj_pc": proj}


# ----------------------------------------------------------------------------
# Parameters: raw (unpadded, f32) and packed (padded, BN-folded, bf16 weights)
# ----------------------------------------------------------------------------

def make_raw_params(key, cin, dim_feat, dim_embed, num_classes):
    ks = jax.random.split(key, 9)
    eps = 1e-5

    def fold_bn(gamma, beta, mean, var):
        scale = gamma / jnp.sqrt(var + eps)
        return scale, beta - mean * scale

    w_bb = jax.random.normal(ks[0], (cin, dim_feat), jnp.float32) * 0.3
    bb_scale, bb_shift = fold_bn(
        1.0 + 0.1 * jax.random.normal(ks[1], (dim_feat,), jnp.float32),
        0.1 * jax.random.normal(ks[2], (dim_feat,), jnp.float32),
        0.05 * jax.random.normal(ks[3], (dim_feat,), jnp.float32),
        1.0 + 0.1 * jnp.abs(jax.random.normal(ks[4], (dim_feat,), jnp.float32)),
    )
    w_cls = jax.random.normal(ks[5], (dim_feat, num_classes), jnp.float32) * 0.1
    b_cls = 0.05 * jax.random.normal(ks[6], (num_classes,), jnp.float32)
    w_p1 = jax.random.normal(ks[7], (dim_feat, dim_feat), jnp.float32) * 0.1
    p_scale, p_shift = fold_bn(
        jnp.ones((dim_feat,), jnp.float32), jnp.zeros((dim_feat,), jnp.float32),
        jnp.zeros((dim_feat,), jnp.float32), jnp.ones((dim_feat,), jnp.float32))
    w_p2 = jax.random.normal(ks[8], (dim_feat, dim_embed), jnp.float32) * 0.1
    return {"w_bb": w_bb, "bb_scale": bb_scale, "bb_shift": bb_shift,
            "w_cls": w_cls, "b_cls": b_cls,
            "w_p1": w_p1, "p_scale": p_scale, "p_shift": p_shift, "w_p2": w_p2}


def prepare_params(raw, h, w, hf, wf):
    cin, dim_feat = raw["w_bb"].shape
    nc = raw["w_cls"].shape[1]
    de = raw["w_p2"].shape[1]
    assert dim_feat <= F_PAD and nc + de <= C_PAD

    # backbone weight with BN scale folded in, padded to F_PAD lanes
    w_bb = jnp.zeros((cin, F_PAD), jnp.float32)
    w_bb = w_bb.at[:, :dim_feat].set(raw["w_bb"] * raw["bb_scale"][None, :])
    bb_shift = jnp.zeros((1, F_PAD), jnp.float32)
    bb_shift = bb_shift.at[0, :dim_feat].set(raw["bb_shift"])

    # [ projection conv1 (BN folded) | classifier conv ] combined weight
    w_p1f = raw["w_p1"] * raw["p_scale"][None, :]
    w_feat = jnp.zeros((F_PAD, F_PAD + C_PAD), jnp.float32)
    w_feat = w_feat.at[:dim_feat, :dim_feat].set(w_p1f)
    w_feat = w_feat.at[:dim_feat, F_PAD:F_PAD + nc].set(raw["w_cls"])
    shift_head = jnp.zeros((1, F_PAD + C_PAD), jnp.float32)
    shift_head = shift_head.at[0, :dim_feat].set(raw["p_shift"])
    shift_head = shift_head.at[0, F_PAD:F_PAD + nc].set(raw["b_cls"])

    # projection conv2, output placed at lanes [nc, nc+de) of the combined out
    w_p2 = jnp.zeros((F_PAD, C_PAD), jnp.float32)
    w_p2 = w_p2.at[:dim_feat, nc:nc + de].set(raw["w_p2"])

    return {
        "w_bb": w_bb.astype(jnp.bfloat16),
        "bb_shift": bb_shift,
        "w_feat": w_feat.astype(jnp.bfloat16),
        "shift_head": shift_head,
        "w_p2": w_p2.astype(jnp.bfloat16),
        "U_h": jnp.asarray(bilinear_matrix(h, hf)),
        "U_w": jnp.asarray(bilinear_matrix(w, wf)),
        "num_classes": nc,
        "dim_embed": de,
    }


# ----------------------------------------------------------------------------
# Pure-JAX references
# ----------------------------------------------------------------------------

def _ref_upsample(y_flat, n, hf, wf, u_h, u_w):
    c = y_flat.shape[-1]
    y = y_flat.reshape(n, hf, wf, c)
    t = jnp.einsum("oh,nhwc->nowc", u_h, y)
    t = jnp.einsum("pw,nowc->nopc", u_w, t)
    return jnp.transpose(t, (0, 3, 1, 2))                     # NCHW


def reference_matched(x, raw, u_h, u_w):
    """Mirrors the kernel's numerical recipe (bf16 matmul inputs, f32 accum)
    from the raw (unpadded) parameters — validates padding/folding/plumbing."""
    n, cin, _, _ = x.shape
    xs = x[:, :, ::2, ::2]
    hf, wf = xs.shape[2], xs.shape[3]
    xf = jnp.transpose(xs, (0, 2, 3, 1)).reshape(-1, cin).astype(jnp.bfloat16)

    wbb = (raw["w_bb"] * raw["bb_scale"][None, :]).astype(jnp.bfloat16)
    feat = jnp.maximum(
        jnp.dot(xf, wbb, preferred_element_type=jnp.float32) + raw["bb_shift"],
        0.0)
    featb = feat.astype(jnp.bfloat16)
    logits = jnp.dot(featb, raw["w_cls"].astype(jnp.bfloat16),
                     preferred_element_type=jnp.float32) + raw["b_cls"]
    wp1 = (raw["w_p1"] * raw["p_scale"][None, :]).astype(jnp.bfloat16)
    hid = jnp.maximum(
        jnp.dot(featb, wp1, preferred_element_type=jnp.float32) + raw["p_shift"],
        0.0).astype(jnp.bfloat16)
    pr = jnp.dot(hid, raw["w_p2"].astype(jnp.bfloat16),
                 preferred_element_type=jnp.float32)
    pr = pr * jax.lax.rsqrt(
        jnp.maximum(jnp.sum(pr * pr, axis=-1, keepdims=True), 1e-24))
    return {"out": _ref_upsample(logits, n, hf, wf, u_h, u_w),
            "proj_pc": _ref_upsample(pr, n, hf, wf, u_h, u_w)}


def reference_f32(x, raw, u_h, u_w):
    """True (full-precision) semantics of the module, for a loose sanity check."""
    n, cin, _, _ = x.shape
    xs = x[:, :, ::2, ::2]
    hf, wf = xs.shape[2], xs.shape[3]
    xf = jnp.transpose(xs, (0, 2, 3, 1)).reshape(-1, cin)
    feat = jnp.maximum(xf @ raw["w_bb"] * raw["bb_scale"] + raw["bb_shift"], 0.0)
    logits = feat @ raw["w_cls"] + raw["b_cls"]
    hid = jnp.maximum(feat @ raw["w_p1"] * raw["p_scale"] + raw["p_shift"], 0.0)
    pr = hid @ raw["w_p2"]
    pr = pr / jnp.maximum(jnp.linalg.norm(pr, axis=-1, keepdims=True), 1e-12)
    return {"out": _ref_upsample(logits, n, hf, wf, u_h, u_w),
            "proj_pc": _ref_upsample(pr, n, hf, wf, u_h, u_w)}


# ----------------------------------------------------------------------------
# Run + check
# ----------------------------------------------------------------------------

if __name__ == "__main__":
    N, CIN, H, W = 2, 4, 16, 16
    DIM_FEAT, DIM_EMBED, NUM_CLASSES = 32, 16, 8
    HF, WF = H // 2, W // 2

    key = jax.random.PRNGKey(0)
    kx, kp = jax.random.split(key)
    x = jax.random.normal(kx, (N, CIN, H, W), jnp.float32)

    raw = make_raw_params(kp, CIN, DIM_FEAT, DIM_EMBED, NUM_CLASSES)
    params = prepare_params(raw, H, W, HF, WF)

    fwd = jax.jit(functools.partial(deeplabv3_contrast_forward, params=params))
    result = fwd(x)
    jax.block_until_ready(result)

    assert result["out"].shape == (N, NUM_CLASSES, H, W)
    assert result["proj_pc"].shape == (N, DIM_EMBED, H, W)

    # strict check vs. reference using the same bf16-matmul recipe
    ref_m = reference_matched(x, raw, params["U_h"], params["U_w"])
    for k in ("out", "proj_pc"):
        np.testing.assert_allclose(np.asarray(result[k]), np.asarray(ref_m[k]),
                                   rtol=5e-3, atol=5e-3)

    # loose sanity check vs. the full-precision module semantics
    ref_f = reference_f32(x, raw, params["U_h"], params["U_w"])
    for k in ("out", "proj_pc"):
        np.testing.assert_allclose(np.asarray(result[k]), np.asarray(ref_f[k]),
                                   rtol=7e-2, atol=7e-2)

    print("KERNEL_OK")
</pallas_src>

<mosaic_0001>
module attributes {stable_mosaic.version = 11 : i64} {
  func.func @_h_interp_kernel(%arg0: i32, %arg1: memref<16x8xf32, #tpu.memory_space<vmem>>, %arg2: memref<1x8x1024xf32, #tpu.memory_space<vmem>>, %arg3: memref<1x16x1024xf32, #tpu.memory_space<vmem>>) attributes {dimension_semantics = [#tpu.dimension_semantics<parallel>], iteration_bounds = array<i64: 2>, scalar_prefetch = 0 : i64, scratch_operands = 0 : i64, tpu.core_type = #tpu.core_type<tc>, window_params = [{pipeline_mode = #tpu.pipeline_mode<synchronous>, transform_indices = @transform_0, window_bounds = array<i64: 16, 8>}, {transform_indices = @transform_1, window_bounds = array<i64: 1, 8, 1024>}, {transform_indices = @transform_2, window_bounds = array<i64: 1, 16, 1024>}]} {
    %c0 = arith.constant 0 : index
    %c0_0 = arith.constant 0 : index
    %0 = vector.load %arg1[%c0, %c0_0] : memref<16x8xf32, #tpu.memory_space<vmem>>, vector<16x8xf32>
    %c0_1 = arith.constant 0 : index
    %c0_2 = arith.constant 0 : index
    %c0_3 = arith.constant 0 : index
    %1 = vector.load %arg2[%c0_1, %c0_2, %c0_3] : memref<1x8x1024xf32, #tpu.memory_space<vmem>>, vector<1x8x1024xf32>
    %2 = vector.shape_cast %1 : vector<1x8x1024xf32> to vector<8x1024xf32>
    %cst = arith.constant dense<0.000000e+00> : vector<16x1024xf32>
    %3 = tpu.matmul %0, %2, %cst {dimension_numbers = #tpu.dot_dimension_numbers<[1], [0], [0], [1], [0, 0, 1, 1], [], []>} : vector<16x8xf32>, vector<8x1024xf32>, vector<16x1024xf32> -> vector<16x1024xf32>
    %c0_4 = arith.constant 0 : index
    %c0_5 = arith.constant 0 : index
    %c0_6 = arith.constant 0 : index
    %4 = vector.load %arg3[%c0_4, %c0_5, %c0_6] : memref<1x16x1024xf32, #tpu.memory_space<vmem>>, vector<1x16x1024xf32>
    %5 = vector.shape_cast %4 : vector<1x16x1024xf32> to vector<16x1024xf32>
    %6 = vector.shape_cast %3 : vector<16x1024xf32> to vector<1x16x1024xf32>
    tpu.vector_store %arg3[%c0_4, %c0_5, %c0_6], %6 {strides = array<i32>} : memref<1x16x1024xf32, #tpu.memory_space<vmem>>, vector<1x16x1024xf32>,
    return
  }
  func.func @transform_0(%arg0: i32) -> (i32, i32) {
    %c0_i32 = arith.constant 0 : i32
    %c0_i32_0 = arith.constant 0 : i32
    %c0_i32_1 = arith.constant 0 : i32
    return %c0_i32, %c0_i32_0 : i32, i32
  }
  func.func @transform_1(%arg0: i32) -> (i32, i32, i32) {
    %c0_i32 = arith.constant 0 : i32
    %c0_i32_0 = arith.constant 0 : i32
    %c0_i32_1 = arith.constant 0 : i32
    return %arg0, %c0_i32, %c0_i32_0 : i32, i32, i32
  }
  func.func @transform_2(%arg0: i32) -> (i32, i32, i32) {
    %c0_i32 = arith.constant 0 : i32
    %c0_i32_0 = arith.constant 0 : i32
    %c0_i32_1 = arith.constant 0 : i32
    return %arg0, %c0_i32, %c0_i32_0 : i32, i32, i32
  }
}

module attributes {stable_mosaic.version = 11 : i64} {
  func.func @_fused_head_kernel(%arg0: i32, %arg1: memref<64x4xbf16, #tpu.memory_space<vmem>>, %arg2: memref<4x128xbf16, #tpu.memory_space<vmem>>, %arg3: memref<1x128xf32, #tpu.memory_space<vmem>>, %arg4: memref<128x256xbf16, #tpu.memory_space<vmem>>, %arg5: memref<1x256xf32, #tpu.memory_space<vmem>>, %arg6: memref<128x128xbf16, #tpu.memory_space<vmem>>, %arg7: memref<64x128xf32, #tpu.memory_space<vmem>>) attributes {dimension_semantics = [#tpu.dimension_semantics<parallel>], iteration_bounds = array<i64: 2>, scalar_prefetch = 0 : i64, scratch_operands = 0 : i64, tpu.core_type = #tpu.core_type<tc>, window_params = [{transform_indices = @transform_0, window_bounds = array<i64: 64, 4>}, {pipeline_mode = #tpu.pipeline_mode<synchronous>, transform_indices = @transform_1, window_bounds = array<i64: 4, 128>}, {pipeline_mode = #tpu.pipeline_mode<synchronous>, transform_indices = @transform_2, window_bounds = array<i64: 1, 128>}, {pipeline_mode = #tpu.pipeline_mode<synchronous>, transform_indices = @transform_3, window_bounds = array<i64: 128, 256>}, {pipeline_mode = #tpu.pipeline_mode<synchronous>, transform_indices = @transform_4, window_bounds = array<i64: 1, 256>}, {pipeline_mode = #tpu.pipeline_mode<synchronous>, transform_indices = @transform_5, window_bounds = array<i64: 128, 128>}, {transform_indices = @transform_6, window_bounds = array<i64: 64, 128>}]} {
    %c0 = arith.constant 0 : index
    %c0_0 = arith.constant 0 : index
    %0 = vector.load %arg1[%c0, %c0_0] : memref<64x4xbf16, #tpu.memory_space<vmem>>, vector<64x4xbf16>
    %c0_1 = arith.constant 0 : index
    %c0_2 = arith.constant 0 : index
    %1 = vector.load %arg2[%c0_1, %c0_2] : memref<4x128xbf16, #tpu.memory_space<vmem>>, vector<4x128xbf16>
    %cst = arith.constant dense<0.000000e+00> : vector<64x128xf32>
    %2 = tpu.matmul %0, %1, %cst {dimension_numbers = #tpu.dot_dimension_numbers<[1], [0], [0], [1], [0, 0, 1, 1], [], []>} : vector<64x4xbf16>, vector<4x128xbf16>, vector<64x128xf32> -> vector<64x128xf32>
    %c0_3 = arith.constant 0 : index
    %c0_4 = arith.constant 0 : index
    %3 = vector.load %arg3[%c0_3, %c0_4] : memref<1x128xf32, #tpu.memory_space<vmem>>, vector<1x128xf32>
    %4 = vector.broadcast %3 : vector<1x128xf32> to vector<64x128xf32>
    %5 = arith.addf %2, %4 : vector<64x128xf32>
    %cst_5 = arith.constant 0.000000e+00 : f32
    %6 = vector.broadcast %cst_5 : f32 to vector<64x128xf32>
    %7 = arith.maximumf %5, %6 : vector<64x128xf32>
    %8 = arith.truncf %7 : vector<64x128xf32> to vector<64x128xbf16>
    %c0_6 = arith.constant 0 : index
    %c0_7 = arith.constant 0 : index
    %9 = vector.load %arg4[%c0_6, %c0_7] : memref<128x256xbf16, #tpu.memory_space<vmem>>, vector<128x256xbf16>
    %cst_8 = arith.constant dense<0.000000e+00> : vector<64x256xf32>
    %10 = tpu.matmul %8, %9, %cst_8 {dimension_numbers = #tpu.dot_dimension_numbers<[1], [0], [0], [1], [0, 0, 1, 1], [], []>} : vector<64x128xbf16>, vector<128x256xbf16>, vector<64x256xf32> -> vector<64x256xf32>
    %c0_9 = arith.constant 0 : index
    %c0_10 = arith.constant 0 : index
    %11 = vector.load %arg5[%c0_9, %c0_10] : memref<1x256xf32, #tpu.memory_space<vmem>>, vector<1x256xf32>
    %12 = vector.broadcast %11 : vector<1x256xf32> to vector<64x256xf32>
    %13 = arith.addf %10, %12 : vector<64x256xf32>
    %14 = vector.extract_strided_slice %13 {offsets = [0, 0], sizes = [64, 128], strides = [1, 1]} : vector<64x256xf32> to vector<64x128xf32>
    %cst_11 = arith.constant 0.000000e+00 : f32
    %15 = vector.broadcast %cst_11 : f32 to vector<64x128xf32>
    %16 = arith.maximumf %14, %15 : vector<64x128xf32>
    %17 = arith.truncf %16 : vector<64x128xf32> to vector<64x128xbf16>
    %18 = vector.extract_strided_slice %13 {offsets = [0, 128], sizes = [64, 128], strides = [1, 1]} : vector<64x256xf32> to vector<64x128xf32>
    %c0_12 = arith.constant 0 : index
    %c0_13 = arith.constant 0 : index
    %19 = vector.load %arg6[%c0_12, %c0_13] : memref<128x128xbf16, #tpu.memory_space<vmem>>, vector<128x128xbf16>
    %cst_14 = arith.constant dense<0.000000e+00> : vector<64x128xf32>
    %20 = tpu.matmul %17, %19, %cst_14 {dimension_numbers = #tpu.dot_dimension_numbers<[1], [0], [0], [1], [0, 0, 1, 1], [], []>} : vector<64x128xbf16>, vector<128x128xbf16>, vector<64x128xf32> -> vector<64x128xf32>
    %21 = arith.mulf %20, %20 : vector<64x128xf32>
    %cst_15 = arith.constant dense<0.000000e+00> : vector<64xf32>
    %22 = vector.multi_reduction <add>, %21, %cst_15 [1] : vector<64x128xf32> to vector<64xf32>
    %23 = vector.shape_cast %22 : vector<64xf32> to vector<64x1xf32>
    %cst_16 = arith.constant 1.000000e-24 : f32
    %24 = vector.broadcast %cst_16 : f32 to vector<64x1xf32>
    %25 = arith.maximumf %23, %24 : vector<64x1xf32>
    %26 = math.rsqrt %25 : vector<64x1xf32>
    %27 = vector.broadcast %26 : vector<64x1xf32> to vector<64x128xf32>
    %28 = arith.mulf %20, %27 : vector<64x128xf32>
    %29 = arith.addf %18, %28 : vector<64x128xf32>
    %c0_17 = arith.constant 0 : index
    %c0_18 = arith.constant 0 : index
    %30 = vector.load %arg7[%c0_17, %c0_18] : memref<64x128xf32, #tpu.memory_space<vmem>>, vector<64x128xf32>
    tpu.vector_store %arg7[%c0_17, %c0_18], %29 {strides = array<i32>} : memref<64x128xf32, #tpu.memory_space<vmem>>, vector<64x128xf32>,
    return
  }
  func.func @transform_0(%arg0: i32) -> (i32, i32) {
    %c0_i32 = arith.constant 0 : i32
    %c0_i32_0 = arith.constant 0 : i32
    return %arg0, %c0_i32 : i32, i32
  }
  func.func @transform_1(%arg0: i32) -> (i32, i32) {
    %c0_i32 = arith.constant 0 : i32
    %c0_i32_0 = arith.constant 0 : i32
    %c0_i32_1 = arith.constant 0 : i32
    return %c0_i32, %c0_i32_0 : i32, i32
  }
  func.func @transform_2(%arg0: i32) -> (i32, i32) {
    %c0_i32 = arith.constant 0 : i32
    %c0_i32_0 = arith.constant 0 : i32
    %c0_i32_1 = arith.constant 0 : i32
    return %c0_i32, %c0_i32_0 : i32, i32
  }
  func.func @transform_3(%arg0: i32) -> (i32, i32) {
    %c0_i32 = arith.constant 0 : i32
    %c0_i32_0 = arith.constant 0 : i32
    %c0_i32_1 = arith.constant 0 : i32
    return %c0_i32, %c0_i32_0 : i32, i32
  }
  func.func @transform_4(%arg0: i32) -> (i32, i32) {
    %c0_i32 = arith.constant 0 : i32
    %c0_i32_0 = arith.constant 0 : i32
    %c0_i32_1 = arith.constant 0 : i32
    return %c0_i32, %c0_i32_0 : i32, i32
  }
  func.func @transform_5(%arg0: i32) -> (i32, i32) {
    %c0_i32 = arith.constant 0 : i32
    %c0_i32_0 = arith.constant 0 : i32
    %c0_i32_1 = arith.constant 0 : i32
    return %c0_i32, %c0_i32_0 : i32, i32
  }
  func.func @transform_6(%arg0: i32) -> (i32, i32) {
    %c0_i32 = arith.constant 0 : i32
    %c0_i32_0 = arith.constant 0 : i32
    return %arg0, %c0_i32 : i32, i32
  }
}

module attributes {stable_mosaic.version = 11 : i64} {
  func.func @_w_interp_kernel(%arg0: i32, %arg1: memref<16x8xf32, #tpu.memory_space<vmem>>, %arg2: memref<8x8x128xf32, #tpu.memory_space<vmem>>, %arg3: memref<8x16x128xf32, #tpu.memory_space<vmem>>) attributes {dimension_semantics = [#tpu.dimension_semantics<parallel>], iteration_bounds = array<i64: 4>, scalar_prefetch = 0 : i64, scratch_operands = 0 : i64, tpu.core_type = #tpu.core_type<tc>, window_params = [{pipeline_mode = #tpu.pipeline_mode<synchronous>, transform_indices = @transform_0, window_bounds = array<i64: 16, 8>}, {transform_indices = @transform_1, window_bounds = array<i64: 8, 8, 128>}, {transform_indices = @transform_2, window_bounds = array<i64: 8, 16, 128>}]} {
    %c0 = arith.constant 0 : index
    %c0_0 = arith.constant 0 : index
    %0 = vector.load %arg1[%c0, %c0_0] : memref<16x8xf32, #tpu.memory_space<vmem>>, vector<16x8xf32>
    %c0_1 = arith.constant 0 : index
    %c0_2 = arith.constant 0 : index
    %c0_3 = arith.constant 0 : index
    %1 = vector.load %arg2[%c0_1, %c0_2, %c0_3] : memref<8x8x128xf32, #tpu.memory_space<vmem>>, vector<1x8x128xf32>
    %2 = vector.shape_cast %1 : vector<1x8x128xf32> to vector<8x128xf32>
    %cst = arith.constant dense<0.000000e+00> : vector<16x128xf32>
    %3 = tpu.matmul %0, %2, %cst {dimension_numbers = #tpu.dot_dimension_numbers<[1], [0], [0], [1], [0, 0, 1, 1], [], []>} : vector<16x8xf32>, vector<8x128xf32>, vector<16x128xf32> -> vector<16x128xf32>
    %c0_4 = arith.constant 0 : index
    %c0_5 = arith.constant 0 : index
    %c0_6 = arith.constant 0 : index
    %4 = vector.load %arg3[%c0_4, %c0_5, %c0_6] : memref<8x16x128xf32, #tpu.memory_space<vmem>>, vector<1x16x128xf32>
    %5 = vector.shape_cast %4 : vector<1x16x128xf32> to vector<16x128xf32>
    %6 = vector.shape_cast %3 : vector<16x128xf32> to vector<1x16x128xf32>
    tpu.vector_store %arg3[%c0_4, %c0_5, %c0_6], %6 {strides = array<i32>} : memref<8x16x128xf32, #tpu.memory_space<vmem>>, vector<1x16x128xf32>,
    %c1 = arith.constant 1 : index
    %c0_7 = arith.constant 0 : index
    %c0_8 = arith.constant 0 : index
    %7 = vector.load %arg2[%c1, %c0_7, %c0_8] : memref<8x8x128xf32, #tpu.memory_space<vmem>>, vector<1x8x128xf32>
    %8 = vector.shape_cast %7 : vector<1x8x128xf32> to vector<8x128xf32>
    %cst_9 = arith.constant dense<0.000000e+00> : vector<16x128xf32>
    %9 = tpu.matmul %0, %8, %cst_9 {dimension_numbers = #tpu.dot_dimension_numbers<[1], [0], [0], [1], [0, 0, 1, 1], [], []>} : vector<16x8xf32>, vector<8x128xf32>, vector<16x128xf32> -> vector<16x128xf32>
    %c1_10 = arith.constant 1 : index
    %c0_11 = arith.constant 0 : index
    %c0_12 = arith.constant 0 : index
    %10 = vector.load %arg3[%c1_10, %c0_11, %c0_12] : memref<8x16x128xf32, #tpu.memory_space<vmem>>, vector<1x16x128xf32>
    %11 = vector.shape_cast %10 : vector<1x16x128xf32> to vector<16x128xf32>
    %12 = vector.shape_cast %9 : vector<16x128xf32> to vector<1x16x128xf32>
    tpu.vector_store %arg3[%c1_10, %c0_11, %c0_12], %12 {strides = array<i32>} : memref<8x16x128xf32, #tpu.memory_space<vmem>>, vector<1x16x128xf32>,
    %c2 = arith.constant 2 : index
    %c0_13 = arith.constant 0 : index
    %c0_14 = arith.constant 0 : index
    %13 = vector.load %arg2[%c2, %c0_13, %c0_14] : memref<8x8x128xf32, #tpu.memory_space<vmem>>, vector<1x8x128xf32>
    %14 = vector.shape_cast %13 : vector<1x8x128xf32> to vector<8x128xf32>
    %cst_15 = arith.constant dense<0.000000e+00> : vector<16x128xf32>
    %15 = tpu.matmul %0, %14, %cst_15 {dimension_numbers = #tpu.dot_dimension_numbers<[1], [0], [0], [1], [0, 0, 1, 1], [], []>} : vector<16x8xf32>, vector<8x128xf32>, vector<16x128xf32> -> vector<16x128xf32>
    %c2_16 = arith.constant 2 : index
    %c0_17 = arith.constant 0 : index
    %c0_18 = arith.constant 0 : index
    %16 = vector.load %arg3[%c2_16, %c0_17, %c0_18] : memref<8x16x128xf32, #tpu.memory_space<vmem>>, vector<1x16x128xf32>
    %17 = vector.shape_cast %16 : vector<1x16x128xf32> to vector<16x128xf32>
    %18 = vector.shape_cast %15 : vector<16x128xf32> to vector<1x16x128xf32>
    tpu.vector_store %arg3[%c2_16, %c0_17, %c0_18], %18 {strides = array<i32>} : memref<8x16x128xf32, #tpu.memory_space<vmem>>, vector<1x16x128xf32>,
    %c3 = arith.constant 3 : index
    %c0_19 = arith.constant 0 : index
    %c0_20 = arith.constant 0 : index
    %19 = vector.load %arg2[%c3, %c0_19, %c0_20] : memref<8x8x128xf32, #tpu.memory_space<vmem>>, vector<1x8x128xf32>
    %20 = vector.shape_cast %19 : vector<1x8x128xf32> to vector<8x128xf32>
    %cst_21 = arith.constant dense<0.000000e+00> : vector<16x128xf32>
    %21 = tpu.matmul %0, %20, %cst_21 {dimension_numbers = #tpu.dot_dimension_numbers<[1], [0], [0], [1], [0, 0, 1, 1], [], []>} : vector<16x8xf32>, vector<8x128xf32>, vector<16x128xf32> -> vector<16x128xf32>
    %c3_22 = arith.constant 3 : index
    %c0_23 = arith.constant 0 : index
    %c0_24 = arith.constant 0 : index
    %22 = vector.load %arg3[%c3_22, %c0_23, %c0_24] : memref<8x16x128xf32, #tpu.memory_space<vmem>>, vector<1x16x128xf32>
    %23 = vector.shape_cast %22 : vector<1x16x128xf32> to vector<16x128xf32>
    %24 = vector.shape_cast %21 : vector<16x128xf32> to vector<1x16x128xf32>
    tpu.vector_store %arg3[%c3_22, %c0_23, %c0_24], %24 {strides = array<i32>} : memref<8x16x128xf32, #tpu.memory_space<vmem>>, vector<1x16x128xf32>,
    %c4 = arith.constant 4 : index
    %c0_25 = arith.constant 0 : index
    %c0_26 = arith.constant 0 : index
    %25 = vector.load %arg2[%c4, %c0_25, %c0_26] : memref<8x8x128xf32, #tpu.memory_space<vmem>>, vector<1x8x128xf32>
    %26 = vector.shape_cast %25 : vector<1x8x128xf32> to vector<8x128xf32>
    %cst_27 = arith.constant dense<0.000000e+00> : vector<16x128xf32>
    %27 = tpu.matmul %0, %26, %cst_27 {dimension_numbers = #tpu.dot_dimension_numbers<[1], [0], [0], [1], [0, 0, 1, 1], [], []>} : vector<16x8xf32>, vector<8x128xf32>, vector<16x128xf32> -> vector<16x128xf32>
    %c4_28 = arith.constant 4 : index
    %c0_29 = arith.constant 0 : index
    %c0_30 = arith.constant 0 : index
    %28 = vector.load %arg3[%c4_28, %c0_29, %c0_30] : memref<8x16x128xf32, #tpu.memory_space<vmem>>, vector<1x16x128xf32>
    %29 = vector.shape_cast %28 : vector<1x16x128xf32> to vector<16x128xf32>
    %30 = vector.shape_cast %27 : vector<16x128xf32> to vector<1x16x128xf32>
    tpu.vector_store %arg3[%c4_28, %c0_29, %c0_30], %30 {strides = array<i32>} : memref<8x16x128xf32, #tpu.memory_space<vmem>>, vector<1x16x128xf32>,
    %c5 = arith.constant 5 : index
    %c0_31 = arith.constant 0 : index
    %c0_32 = arith.constant 0 : index
    %31 = vector.load %arg2[%c5, %c0_31, %c0_32] : memref<8x8x128xf32, #tpu.memory_space<vmem>>, vector<1x8x128xf32>
    %32 = vector.shape_cast %31 : vector<1x8x128xf32> to vector<8x128xf32>
    %cst_33 = arith.constant dense<0.000000e+00> : vector<16x128xf32>
    %33 = tpu.matmul %0, %32, %cst_33 {dimension_numbers = #tpu.dot_dimension_numbers<[1], [0], [0], [1], [0, 0, 1, 1], [], []>} : vector<16x8xf32>, vector<8x128xf32>, vector<16x128xf32> -> vector<16x128xf32>
    %c5_34 = arith.constant 5 : index
    %c0_35 = arith.constant 0 : index
    %c0_36 = arith.constant 0 : index
    %34 = vector.load %arg3[%c5_34, %c0_35, %c0_36] : memref<8x16x128xf32, #tpu.memory_space<vmem>>, vector<1x16x128xf32>
    %35 = vector.shape_cast %34 : vector<1x16x128xf32> to vector<16x128xf32>
    %36 = vector.shape_cast %33 : vector<16x128xf32> to vector<1x16x128xf32>
    tpu.vector_store %arg3[%c5_34, %c0_35, %c0_36], %36 {strides = array<i32>} : memref<8x16x128xf32, #tpu.memory_space<vmem>>, vector<1x16x128xf32>,
    %c6 = arith.constant 6 : index
    %c0_37 = arith.constant 0 : index
    %c0_38 = arith.constant 0 : index
    %37 = vector.load %arg2[%c6, %c0_37, %c0_38] : memref<8x8x128xf32, #tpu.memory_space<vmem>>, vector<1x8x128xf32>
    %38 = vector.shape_cast %37 : vector<1x8x128xf32> to vector<8x128xf32>
    %cst_39 = arith.constant dense<0.000000e+00> : vector<16x128xf32>
    %39 = tpu.matmul %0, %38, %cst_39 {dimension_numbers = #tpu.dot_dimension_numbers<[1], [0], [0], [1], [0, 0, 1, 1], [], []>} : vector<16x8xf32>, vector<8x128xf32>, vector<16x128xf32> -> vector<16x128xf32>
    %c6_40 = arith.constant 6 : index
    %c0_41 = arith.constant 0 : index
    %c0_42 = arith.constant 0 : index
    %40 = vector.load %arg3[%c6_40, %c0_41, %c0_42] : memref<8x16x128xf32, #tpu.memory_space<vmem>>, vector<1x16x128xf32>
    %41 = vector.shape_cast %40 : vector<1x16x128xf32> to vector<16x128xf32>
    %42 = vector.shape_cast %39 : vector<16x128xf32> to vector<1x16x128xf32>
    tpu.vector_store %arg3[%c6_40, %c0_41, %c0_42], %42 {strides = array<i32>} : memref<8x16x128xf32, #tpu.memory_space<vmem>>, vector<1x16x128xf32>,
    %c7 = arith.constant 7 : index
    %c0_43 = arith.constant 0 : index
    %c0_44 = arith.constant 0 : index
    %43 = vector.load %arg2[%c7, %c0_43, %c0_44] : memref<8x8x128xf32, #tpu.memory_space<vmem>>, vector<1x8x128xf32>
    %44 = vector.shape_cast %43 : vector<1x8x128xf32> to vector<8x128xf32>
    %cst_45 = arith.constant dense<0.000000e+00> : vector<16x128xf32>
    %45 = tpu.matmul %0, %44, %cst_45 {dimension_numbers = #tpu.dot_dimension_numbers<[1], [0], [0], [1], [0, 0, 1, 1], [], []>} : vector<16x8xf32>, vector<8x128xf32>, vector<16x128xf32> -> vector<16x128xf32>
    %c7_46 = arith.constant 7 : index
    %c0_47 = arith.constant 0 : index
    %c0_48 = arith.constant 0 : index
    %46 = vector.load %arg3[%c7_46, %c0_47, %c0_48] : memref<8x16x128xf32, #tpu.memory_space<vmem>>, vector<1x16x128xf32>
    %47 = vector.shape_cast %46 : vector<1x16x128xf32> to vector<16x128xf32>
    %48 = vector.shape_cast %45 : vector<16x128xf32> to vector<1x16x128xf32>
    tpu.vector_store %arg3[%c7_46, %c0_47, %c0_48], %48 {strides = array<i32>} : memref<8x16x128xf32, #tpu.memory_space<vmem>>, vector<1x16x128xf32>,
    return
  }
  func.func @transform_0(%arg0: i32) -> (i32, i32) {
    %c0_i32 = arith.constant 0 : i32
    %c0_i32_0 = arith.constant 0 : i32
    %c0_i32_1 = arith.constant 0 : i32
    return %c0_i32, %c0_i32_0 : i32, i32
  }
  func.func @transform_1(%arg0: i32) -> (i32, i32, i32) {
    %c0_i32 = arith.constant 0 : i32
    %c0_i32_0 = arith.constant 0 : i32
    %c0_i32_1 = arith.constant 0 : i32
    return %arg0, %c0_i32, %c0_i32_0 : i32, i32, i32
  }
  func.func @transform_2(%arg0: i32) -> (i32, i32, i32) {
    %c0_i32 = arith.constant 0 : i32
    %c0_i32_0 = arith.constant 0 : i32
    %c0_i32_1 = arith.constant 0 : i32
    return %arg0, %c0_i32, %c0_i32_0 : i32, i32, i32
  }
}

</mosaic_0001>

<llo_original>
// kernel: deeplabv3_contrast_forward.4
$region0: #{deeplabv3_contrast_forward.4}
  #allocation0 [shape = 'u32[]', space=smem, size = 0x4, offset = 0x4, fixed_abs, tag = 'smem constant byte address 0x4 - core index']
  #allocation1 [shape = 'u32[144,128]{1,0:T(1,128)}', space=vmem, size = 0x12000, scoped, tag = 'internal scratch']
  %s0 = inlined_call_operand.vmem [shape: f32[16,8], index: 0, kind: input, shape index: {}]
  %s1 = inlined_call_operand.vmem [shape: f32[2,8,1024], index: 1, kind: input, shape index: {}]
  %s2 = inlined_call_operand.vmem [shape: f32[2,16,1024], index: 2, kind: output, shape index: {}]
  %s3 = sld [smem:[#allocation0]]
  $region41: #{deeplabv3_contrast_forward.4} parent=0
    _
  %s5 = ssub.s32 1, %s3
  %s6 = scalar_select 0, %s5, %s3
  loop: start=0, step=1, limit=4
  $region2: #{deeplabv3_contrast_forward.4} parent=0 // loop_pre_header
    _
  $region3: #{deeplabv3_contrast_forward.4} parent=0 // loop_header
    %s8 = sphi 0, %s12
    %p9 = scmp.ge.s32.totalorder %s8, 4
    %s16 = sphi 0, %s16
    %s18 = sphi 0, %s16
    %s19 = sphi 0, %s18
    %s33 = sphi 0, %s19
    %s39 = sphi 0, %s41
    %s42 = sphi 0, %s39
    %s43 = sphi 0, %s42
    %s59 = sphi 0, %s43
    %s65 = sphi 0, %s67
    %s68 = sphi 0, %s65
    %s69 = sphi 0, %s68
    %s85 = sphi 0, %s69
  $region4: #{deeplabv3_contrast_forward.4} parent=0 // loop_header_branch
    %11 = sbr.rel (%p9) target = $region8
  $region5: #{deeplabv3_contrast_forward.4} parent=0 // loop_body
    %s13 = ssub.s32 %s8, 1
    %s14 = ssub.s32 %s8, 2
    %s15 = sadd.s32 %s8, 1
    %s17 = sadd.s32 %s16, 1
    %p20 = scmp.eq.s32.totalorder %s8, 1
    %p21 = scmp.ne.s32.totalorder %s16, %s18
    %p22 = scmp.eq.s32.totalorder %s8, 0
    %p23 = por %p21, %p22
    %p24 = scmp.ne.s32.totalorder %s16, %s18
    %p25 = scmp.eq.s32.totalorder %s13, 1
    %p26 = por %p24, %p25
    %p27 = scmp.ne.s32.totalorder %s18, %s19
    %p28 = scmp.eq.s32.totalorder %s13, 0
    %p29 = por %p27, %p28
    %p30 = scmp.ne.s32.totalorder %s18, %s19
    %p31 = scmp.eq.s32.totalorder %s14, 1
    %p32 = por %p30, %p31
    %p34 = scmp.ne.s32.totalorder %s19, %s33
    %p35 = scmp.eq.s32.totalorder %s14, 0
    %p36 = por %p34, %p35
    %s37 = ssub.s32 %s8, %s15
    %p38 = scmp.eq.s32.totalorder %s37, 0
    %s40 = sadd.s32 %s39, 1
    %s41 = scalar_select %p38, %s39, %s40
    %p44 = pneg %p38
    %p45 = scmp.eq.s32.totalorder %s8, 1
    %p46 = por %p44, %p45
    %p47 = scmp.ne.s32.totalorder %s39, %s42
    %p48 = scmp.eq.s32.totalorder %s8, 0
    %p49 = por %p47, %p48
    %p50 = scmp.ne.s32.totalorder %s39, %s42
    %p51 = scmp.eq.s32.totalorder %s13, 1
    %p52 = por %p50, %p51
    %p53 = scmp.ne.s32.totalorder %s42, %s43
    %p54 = scmp.eq.s32.totalorder %s13, 0
    %p55 = por %p53, %p54
    %p56 = scmp.ne.s32.totalorder %s42, %s43
    %p57 = scmp.eq.s32.totalorder %s14, 1
    %p58 = por %p56, %p57
    %p60 = scmp.ne.s32.totalorder %s43, %s59
    %p61 = scmp.eq.s32.totalorder %s14, 0
    %p62 = por %p60, %p61
    %s63 = ssub.s32 %s8, %s15
    %p64 = scmp.eq.s32.totalorder %s63, 0
    %s66 = sadd.s32 %s65, 1
    %s67 = scalar_select %p64, %s65, %s66
    %p70 = pneg %p64
    %p71 = scmp.eq.s32.totalorder %s8, 1
    %p72 = por %p70, %p71
    %p73 = scmp.ne.s32.totalorder %s65, %s68
    %p74 = scmp.eq.s32.totalorder %s8, 0
    %p75 = por %p73, %p74
    %p76 = scmp.ne.s32.totalorder %s65, %s68
    %p77 = scmp.eq.s32.totalorder %s13, 1
    %p78 = por %p76, %p77
    %p79 = scmp.ne.s32.totalorder %s68, %s69
    %p80 = scmp.eq.s32.totalorder %s13, 0
    %p81 = por %p79, %p80
    %p82 = scmp.ne.s32.totalorder %s68, %s69
    %p83 = scmp.eq.s32.totalorder %s14, 1
    %p84 = por %p82, %p83
    %p86 = scmp.ne.s32.totalorder %s69, %s85
    %p87 = scmp.eq.s32.totalorder %s14, 0
    %p88 = por %p86, %p87
    %p89 = scmp.le.s32.totalorder 1, %s8
    %p90 = scmp.lt.s32.totalorder %s8, 3
    %p91 = pnand %p89, %p90
    %p92 = pneg %p91
    // Predicated region
    $region9: #{deeplabv3_contrast_forward.4} parent=5 // pred_check
      _
    $region10: #{deeplabv3_contrast_forward.4} parent=5 // pred_check_branch
      %94 = sbr.rel (%p91) target = $region12
    $region11: #{deeplabv3_contrast_forward.4} parent=5 // pred_region
      %s95 = ssub.s32 %s8, 1
      // Predicated region
      $region13: #{deeplabv3_contrast_forward.4} parent=11 // pred_check
        %p96 = pneg %p29
      $region14: #{deeplabv3_contrast_forward.4} parent=11 // pred_check_branch
        %98 = sbr.rel (%p96) target = $region16
      $region15: #{deeplabv3_contrast_forward.4} parent=11 // pred_region
        _
      $region16: #{deeplabv3_contrast_forward.4} parent=11 // pred_fallthru
        _
    $region12: #{deeplabv3_contrast_forward.4} parent=5 // pred_fallthru
      _
    %p99 = scmp.lt.s32.totalorder %s8, 2
    // Predicated region
    $region17: #{deeplabv3_contrast_forward.4} parent=5 // pred_check
      %p100 = pneg %p99
    $region18: #{deeplabv3_contrast_forward.4} parent=5 // pred_check_branch
      %102 = sbr.rel (%p100) target = $region20
    $region19: #{deeplabv3_contrast_forward.4} parent=5 // pred_region
      // Predicated region
      $region21: #{deeplabv3_contrast_forward.4} parent=19 // pred_check
        %p103 = pneg %p49
      $region22: #{deeplabv3_contrast_forward.4} parent=19 // pred_check_branch
        %105 = sbr.rel (%p103) target = $region24
      $region23: #{deeplabv3_contrast_forward.4} parent=19 // pred_region
        %p106 = scmp.lt.s32.totalorder %s8, 1
        %s107 = scalar_select %p106, %s8, 1
        %s108 = smul.addr %s107, 8
        %s109 = smul.addr %s108, 8
        %s110 = scalar_lea.vmem %s1, %s109
      $region24: #{deeplabv3_contrast_forward.4} parent=19 // pred_fallthru
        _
    $region20: #{deeplabv3_contrast_forward.4} parent=5 // pred_fallthru
      _
    %p111 = scmp.le.s32.totalorder 1, %s8
    %p112 = scmp.lt.s32.totalorder %s8, 3
    %p113 = pnand %p111, %p112
    %p114 = pneg %p113
    // Predicated region
    $region25: #{deeplabv3_contrast_forward.4} parent=5 // pred_check
      _
    $region26: #{deeplabv3_contrast_forward.4} parent=5 // pred_check_branch
      %116 = sbr.rel (%p113) target = $region28
    $region27: #{deeplabv3_contrast_forward.4} parent=5 // pred_region
      %s117 = ssub.s32 %s8, 1
      %p118 = pneg %p29
      %p119 = pneg %p26
      %p120 = scmp.lt.s32.totalorder %s13, 1
      %s121 = scalar_select %p120, %s13, 1
      %s122 = smul.addr %s121, 8
      %s123 = smul.addr %s122, 8
      %s124 = scalar_lea.vmem %s1, %s123
      %p125 = pneg %p55
      %p126 = pneg %p52
      %p127 = pneg %p81
      %p128 = pneg %p78
      %p129 = scmp.lt.s32.totalorder %s13, 1
      %s130 = scalar_select %p129, %s13, 1
      %s131 = smul.addr %s130, 16
      %s132 = smul.addr %s131, 8
      %s133 = scalar_lea.vmem %s2, %s132
      %p134 = scmp.lt.s32.totalorder %s13, 1
      %s135 = scalar_select %p134, %s13, 1
      %s136 = smul.addr %s135, 8
      %s137 = smul.addr %s136, 8
      %s138 = scalar_lea.vmem %s1, %s137
      %p139 = scmp.lt.s32.totalorder %s13, 1
      %s140 = scalar_select %p139, %s13, 1
      %s141 = smul.addr %s140, 16
      %s142 = smul.addr %s141, 8
      %s143 = scalar_lea.vmem %s2, %s142
      %v144 = vld [vmem:[%s0] sm:$0xff]
      %v145 = vld [vmem:[%s0 + $0x8] sm:$0xff]
      %v146 = vld [vmem:[%s138] sm:$0xff]
      %v147 = vld [vmem:[%s138 + $0x8] sm:$0xff]
      %v148 = vld [vmem:[%s138 + $0x10] sm:$0xff]
      %v149 = vld [vmem:[%s138 + $0x18] sm:$0xff]
      %v150 = vld [vmem:[%s138 + $0x20] sm:$0xff]
      %v151 = vld [vmem:[%s138 + $0x28] sm:$0xff]
      %v152 = vld [vmem:[%s138 + $0x30] sm:$0xff]
      %v153 = vld [vmem:[%s138 + $0x38] sm:$0xff]
      %vm154 = vcmask 64512
      %v156 = vsel %vm154, %v144, 0
      %v159 = vsel %vm154, %v145, 0
      %161 = vmatprep.subr.mxu0 %v147
      %162 = vmatpush1.msra.mxu0 %v146
      %163 = vmatprep.subr.mxu0 0.0
      %164 = vmatpush1.msra.mxu0 0.0
      %165 = vmatprep.subr.mxu0 0.0
      %166 = vmatpush1.msra.mxu0 0.0
      %167 = vmatprep.subr.mxu0 0.0
      %168 = vmatpush1.msra.mxu0 0.0
      %169 = vmatprep.subr.mxu0 0.0
      %170 = vmatpush1.msra.mxu0 0.0
      %171 = vmatprep.subr.mxu0 0.0
      %172 = vmatpush1.msra.mxu0 0.0
      %173 = vmatprep.subr.mxu0 0.0
      %174 = vmatpush1.msra.mxu0 0.0
      %175 = vmatprep.subr.mxu0 0.0
      %176 = vmatpush1.msra.mxu0 0.0
      %177 = vmatprep.subr.mxu0 0.0
      %178 = vmatpush1.msra.mxu0 0.0
      %179 = vmatprep.subr.mxu0 0.0
      %180 = vmatpush1.msra.mxu0 0.0
      %181 = vmatprep.subr.mxu0 0.0
      %182 = vmatpush1.msra.mxu0 0.0
      %183 = vmatprep.subr.mxu0 0.0
      %184 = vmatpush1.msra.mxu0 0.0
      %185 = vmatprep.subr.mxu0 0.0
      %186 = vmatpush1.msra.mxu0 0.0
      %187 = vmatprep.subr.mxu0 0.0
      %188 = vmatpush1.msra.mxu0 0.0
      %189 = vmatprep.subr.mxu0 0.0
      %190 = vmatpush1.msra.mxu0 0.0
      %191 = vmatprep.subr.mxu0 0.0
      %192 = vmatpush1.msra.mxu0 0.0
      %193 = vmatprep.subr.mxu0 0.0
      %194 = vmatpush1.msra.mxu0 0.0
      %195 = vmatprep.subr.mxu0 0.0
      %196 = vmatpush1.msra.mxu0 0.0
      %197 = vmatprep.subr.mxu0 0.0
      %198 = vmatpush1.msra.mxu0 0.0
      %199 = vmatprep.subr.mxu0 0.0
      %200 = vmatpush1.msra.mxu0 0.0
      %201 = vmatprep.subr.mxu0 0.0
      %202 = vmatpush1.msra.mxu0 0.0
      %203 = vmatprep.subr.mxu0 0.0
      %204 = vmatpush1.msra.mxu0 0.0
      %205 = vmatprep.subr.mxu0 0.0
      %206 = vmatpush1.msra.mxu0 0.0
      %207 = vmatprep.subr.mxu0 0.0
      %208 = vmatpush1.msra.mxu0 0.0
      %209 = vmatprep.subr.mxu0 0.0
      %210 = vmatpush1.msra.mxu0 0.0
      %211 = vmatprep.subr.mxu0 0.0
      %212 = vmatpush1.msra.mxu0 0.0
      %213 = vmatprep.subr.mxu0 0.0
      %214 = vmatpush1.msra.mxu0 0.0
      %215 = vmatprep.subr.mxu0 0.0
      %216 = vmatpush1.msra.mxu0 0.0
      %217 = vmatprep.subr.mxu0 0.0
      %218 = vmatpush1.msra.mxu0 0.0
      %219 = vmatprep.subr.mxu0 0.0
      %220 = vmatpush1.msra.mxu0 0.0
      %221 = vmatprep.subr.mxu0 0.0
      %222 = vmatpush1.msra.mxu0 0.0
      %223 = vmatprep.subr.mxu0 0.0
      %224 = vmatpush1.msra.mxu0 0.0
      %225 = vmatprep.mubr.f32.mxu0 0.0
      %226 = vmatmul.mubr.f32.gmra.mrb[0].mxu0 %v156
      %v227 = vpop.f32.mrb[0].mxu0
      %v228 = vadd.f32 0.0, %v227
      %v229 = vpop.f32.mrb[0].mxu0
      %v230 = vadd.f32 0.0, %v229
      %231 = vmatprep.mubr.f32.mxu0 0.0
      %232 = vmatmul.mubr.f32.gmra.mrb[0].mxu0 %v159
      %v233 = vpop.f32.mrb[0].mxu0
      %v234 = vadd.f32 0.0, %v233
      %v235 = vpop.f32.mrb[0].mxu0
      %v236 = vadd.f32 0.0, %v235
      %237 = vdwg.mxu0
      %238 = vmatprep.subr.mxu0 %v149
      %239 = vmatpush1.msra.mxu0 %v148
      %240 = vmatprep.subr.mxu0 0.0
      %241 = vmatpush1.msra.mxu0 0.0
      %242 = vmatprep.subr.mxu0 0.0
      %243 = vmatpush1.msra.mxu0 0.0
      %244 = vmatprep.subr.mxu0 0.0
      %245 = vmatpush1.msra.mxu0 0.0
      %246 = vmatprep.subr.mxu0 0.0
      %247 = vmatpush1.msra.mxu0 0.0
      %248 = vmatprep.subr.mxu0 0.0
      %249 = vmatpush1.msra.mxu0 0.0
      %250 = vmatprep.subr.mxu0 0.0
      %251 = vmatpush1.msra.mxu0 0.0
      %252 = vmatprep.subr.mxu0 0.0
      %253 = vmatpush1.msra.mxu0 0.0
      %254 = vmatprep.subr.mxu0 0.0
      %255 = vmatpush1.msra.mxu0 0.0
      %256 = vmatprep.subr.mxu0 0.0
      %257 = vmatpush1.msra.mxu0 0.0
      %258 = vmatprep.subr.mxu0 0.0
      %259 = vmatpush1.msra.mxu0 0.0
      %260 = vmatprep.subr.mxu0 0.0
      %261 = vmatpush1.msra.mxu0 0.0
      %262 = vmatprep.subr.mxu0 0.0
      %263 = vmatpush1.msra.mxu0 0.0
      %264 = vmatprep.subr.mxu0 0.0
      %265 = vmatpush1.msra.mxu0 0.0
      %266 = vmatprep.subr.mxu0 0.0
      %267 = vmatpush1.msra.mxu0 0.0
      %268 = vmatprep.subr.mxu0 0.0
      %269 = vmatpush1.msra.mxu0 0.0
      %270 = vmatprep.subr.mxu0 0.0
      %271 = vmatpush1.msra.mxu0 0.0
      %272 = vmatprep.subr.mxu0 0.0
      %273 = vmatpush1.msra.mxu0 0.0
      %274 = vmatprep.subr.mxu0 0.0
      %275 = vmatpush1.msra.mxu0 0.0
      %276 = vmatprep.subr.mxu0 0.0
      %277 = vmatpush1.msra.mxu0 0.0
      %278 = vmatprep.subr.mxu0 0.0
      %279 = vmatpush1.msra.mxu0 0.0
      %280 = vmatprep.subr.mxu0 0.0
      %281 = vmatpush1.msra.mxu0 0.0
      %282 = vmatprep.subr.mxu0 0.0
      %283 = vmatpush1.msra.mxu0 0.0
      %284 = vmatprep.subr.mxu0 0.0
      %285 = vmatpush1.msra.mxu0 0.0
      %286 = vmatprep.subr.mxu0 0.0
      %287 = vmatpush1.msra.mxu0 0.0
      %288 = vmatprep.subr.mxu0 0.0
      %289 = vmatpush1.msra.mxu0 0.0
      %290 = vmatprep.subr.mxu0 0.0
      %291 = vmatpush1.msra.mxu0 0.0
      %292 = vmatprep.subr.mxu0 0.0
      %293 = vmatpush1.msra.mxu0 0.0
      %294 = vmatprep.subr.mxu0 0.0
      %295 = vmatpush1.msra.mxu0 0.0
      %296 = vmatprep.subr.mxu0 0.0
      %297 = vmatpush1.msra.mxu0 0.0
      %298 = vmatprep.subr.mxu0 0.0
      %299 = vmatpush1.msra.mxu0 0.0
      %300 = vmatprep.subr.mxu0 0.0
      %301 = vmatpush1.msra.mxu0 0.0
      %302 = vmatprep.mubr.f32.mxu0 0.0
      %303 = vmatmul.mubr.f32.gmra.mrb[0].mxu0 %v156
      %v304 = vpop.f32.mrb[0].mxu0
      %v305 = vadd.f32 0.0, %v304
      %v306 = vpop.f32.mrb[0].mxu0
      %v307 = vadd.f32 0.0, %v306
      %308 = vmatprep.mubr.f32.mxu0 0.0
      %309 = vmatmul.mubr.f32.gmra.mrb[0].mxu0 %v159
      %v310 = vpop.f32.mrb[0].mxu0
      %v311 = vadd.f32 0.0, %v310
      %v312 = vpop.f32.mrb[0].mxu0
      %v313 = vadd.f32 0.0, %v312
      %314 = vdwg.mxu0
      %315 = vmatprep.subr.mxu0 %v151
      %316 = vmatpush1.msra.mxu0 %v150
      %317 = vmatprep.subr.mxu0 0.0
      %318 = vmatpush1.msra.mxu0 0.0
      %319 = vmatprep.subr.mxu0 0.0
      %320 = vmatpush1.msra.mxu0 0.0
      %321 = vmatprep.subr.mxu0 0.0
      %322 = vmatpush1.msra.mxu0 0.0
      %323 = vmatprep.subr.mxu0 0.0
      %324 = vmatpush1.msra.mxu0 0.0
      %325 = vmatprep.subr.mxu0 0.0
      %326 = vmatpush1.msra.mxu0 0.0
      %327 = vmatprep.subr.mxu0 0.0
      %328 = vmatpush1.msra.mxu0 0.0
      %329 = vmatprep.subr.mxu0 0.0
      %330 = vmatpush1.msra.mxu0 0.0
      %331 = vmatprep.subr.mxu0 0.0
      %332 = vmatpush1.msra.mxu0 0.0
      %333 = vmatprep.subr.mxu0 0.0
      %334 = vmatpush1.msra.mxu0 0.0
      %335 = vmatprep.subr.mxu0 0.0
      %336 = vmatpush1.msra.mxu0 0.0
      %337 = vmatprep.subr.mxu0 0.0
      %338 = vmatpush1.msra.mxu0 0.0
      %339 = vmatprep.subr.mxu0 0.0
      %340 = vmatpush1.msra.mxu0 0.0
      %341 = vmatprep.subr.mxu0 0.0
      %342 = vmatpush1.msra.mxu0 0.0
      %343 = vmatprep.subr.mxu0 0.0
      %344 = vmatpush1.msra.mxu0 0.0
      %345 = vmatprep.subr.mxu0 0.0
      %346 = vmatpush1.msra.mxu0 0.0
      %347 = vmatprep.subr.mxu0 0.0
      %348 = vmatpush1.msra.mxu0 0.0
      %349 = vmatprep.subr.mxu0 0.0
      %350 = vmatpush1.msra.mxu0 0.0
      %351 = vmatprep.subr.mxu0 0.0
      %352 = vmatpush1.msra.mxu0 0.0
      %353 = vmatprep.subr.mxu0 0.0
      %354 = vmatpush1.msra.mxu0 0.0
      %355 = vmatprep.subr.mxu0 0.0
      %356 = vmatpush1.msra.mxu0 0.0
      %357 = vmatprep.subr.mxu0 0.0
      %358 = vmatpush1.msra.mxu0 0.0
      %359 = vmatprep.subr.mxu0 0.0
      %360 = vmatpush1.msra.mxu0 0.0
      %361 = vmatprep.subr.mxu0 0.0
      %362 = vmatpush1.msra.mxu0 0.0
      %363 = vmatprep.subr.mxu0 0.0
      %364 = vmatpush1.msra.mxu0 0.0
      %365 = vmatprep.subr.mxu0 0.0
      %366 = vmatpush1.msra.mxu0 0.0
      %367 = vmatprep.subr.mxu0 0.0
      %368 = vmatpush1.msra.mxu0 0.0
      %369 = vmatprep.subr.mxu0 0.0
      %370 = vmatpush1.msra.mxu0 0.0
      %371 = vmatprep.subr.mxu0 0.0
      %372 = vmatpush1.msra.mxu0 0.0
      %373 = vmatprep.subr.mxu0 0.0
      %374 = vmatpush1.msra.mxu0 0.0
      %375 = vmatprep.subr.mxu0 0.0
      %376 = vmatpush1.msra.mxu0 0.0
      %377 = vmatprep.subr.mxu0 0.0
      %378 = vmatpush1.msra.mxu0 0.0
      %379 = vmatprep.mubr.f32.mxu0 0.0
      %380 = vmatmul.mubr.f32.gmra.mrb[0].mxu0 %v156
      %v381 = vpop.f32.mrb[0].mxu0
      %v382 = vadd.f32 0.0, %v381
      %v383 = vpop.f32.mrb[0].mxu0
      %v384 = vadd.f32 0.0, %v383
      %385 = vmatprep.mubr.f32.mxu0 0.0
      %386 = vmatmul.mubr.f32.gmra.mrb[0].mxu0 %v159
      %v387 = vpop.f32.mrb[0].mxu0
      %v388 = vadd.f32 0.0, %v387
      %v389 = vpop.f32.mrb[0].mxu0
      %v390 = vadd.f32 0.0, %v389
      %391 = vdwg.mxu0
      %392 = vmatprep.subr.mxu0 %v153
      %393 = vmatpush1.msra.mxu0 %v152
      %394 = vmatprep.subr.mxu0 0.0
      %395 = vmatpush1.msra.mxu0 0.0
      %396 = vmatprep.subr.mxu0 0.0
      %397 = vmatpush1.msra.mxu0 0.0
      %398 = vmatprep.subr.mxu0 0.0
      %399 = vmatpush1.msra.mxu0 0.0
      %400 = vmatprep.subr.mxu0 0.0
      %401 = vmatpush1.msra.mxu0 0.0
      %402 = vmatprep.subr.mxu0 0.0
      %403 = vmatpush1.msra.mxu0 0.0
      %404 = vmatprep.subr.mxu0 0.0
      %405 = vmatpush1.msra.mxu0 0.0
      %406 = vmatprep.subr.mxu0 0.0
      %407 = vmatpush1.msra.mxu0 0.0
      %408 = vmatprep.subr.mxu0 0.0
      %409 = vmatpush1.msra.mxu0 0.0
      %410 = vmatprep.subr.mxu0 0.0
      %411 = vmatpush1.msra.mxu0 0.0
      %412 = vmatprep.subr.mxu0 0.0
      %413 = vmatpush1.msra.mxu0 0.0
      %414 = vmatprep.subr.mxu0 0.0
      %415 = vmatpush1.msra.mxu0 0.0
      %416 = vmatprep.subr.mxu0 0.0
      %417 = vmatpush1.msra.mxu0 0.0
      %418 = vmatprep.subr.mxu0 0.0
      %419 = vmatpush1.msra.mxu0 0.0
      %420 = vmatprep.subr.mxu0 0.0
      %421 = vmatpush1.msra.mxu0 0.0
      %422 = vmatprep.subr.mxu0 0.0
      %423 = vmatpush1.msra.mxu0 0.0
      %424 = vmatprep.subr.mxu0 0.0
      %425 = vmatpush1.msra.mxu0 0.0
      %426 = vmatprep.subr.mxu0 0.0
      %427 = vmatpush1.msra.mxu0 0.0
      %428 = vmatprep.subr.mxu0 0.0
      %429 = vmatpush1.msra.mxu0 0.0
      %430 = vmatprep.subr.mxu0 0.0
      %431 = vmatpush1.msra.mxu0 0.0
      %432 = vmatprep.subr.mxu0 0.0
      %433 = vmatpush1.msra.mxu0 0.0
      %434 = vmatprep.subr.mxu0 0.0
      %435 = vmatpush1.msra.mxu0 0.0
      %436 = vmatprep.subr.mxu0 0.0
      %437 = vmatpush1.msra.mxu0 0.0
      %438 = vmatprep.subr.mxu0 0.0
      %439 = vmatpush1.msra.mxu0 0.0
      %440 = vmatprep.subr.mxu0 0.0
      %441 = vmatpush1.msra.mxu0 0.0
      %442 = vmatprep.subr.mxu0 0.0
      %443 = vmatpush1.msra.mxu0 0.0
      %444 = vmatprep.subr.mxu0 0.0
      %445 = vmatpush1.msra.mxu0 0.0
      %446 = vmatprep.subr.mxu0 0.0
      %447 = vmatpush1.msra.mxu0 0.0
      %448 = vmatprep.subr.mxu0 0.0
      %449 = vmatpush1.msra.mxu0 0.0
      %450 = vmatprep.subr.mxu0 0.0
      %451 = vmatpush1.msra.mxu0 0.0
      %452 = vmatprep.subr.mxu0 0.0
      %453 = vmatpush1.msra.mxu0 0.0
      %454 = vmatprep.subr.mxu0 0.0
      %455 = vmatpush1.msra.mxu0 0.0
      %456 = vmatprep.mubr.f32.mxu0 0.0
      %457 = vmatmul.mubr.f32.gmra.mrb[0].mxu0 %v156
      %v458 = vpop.f32.mrb[0].mxu0
      %v459 = vadd.f32 0.0, %v458
      %v460 = vpop.f32.mrb[0].mxu0
      %v461 = vadd.f32 0.0, %v460
      %462 = vmatprep.mubr.f32.mxu0 0.0
      %463 = vmatmul.mubr.f32.gmra.mrb[0].mxu0 %v159
      %v464 = vpop.f32.mrb[0].mxu0
      %v465 = vadd.f32 0.0, %v464
      %v466 = vpop.f32.mrb[0].mxu0
      %v467 = vadd.f32 0.0, %v466
      %468 = vdwg.mxu0
      %469 = vst [vmem:[%s143] sm:$0xff] %v228
      %470 = vst [vmem:[%s143 + $0x8] sm:$0xff] %v230
      %471 = vst [vmem:[%s143 + $0x10] sm:$0xff] %v305
      %472 = vst [vmem:[%s143 + $0x18] sm:$0xff] %v307
      %473 = vst [vmem:[%s143 + $0x20] sm:$0xff] %v382
      %474 = vst [vmem:[%s143 + $0x28] sm:$0xff] %v384
      %475 = vst [vmem:[%s143 + $0x30] sm:$0xff] %v459
      %476 = vst [vmem:[%s143 + $0x38] sm:$0xff] %v461
      %477 = vst [vmem:[%s143 + $0x40] sm:$0xff] %v234
      %478 = vst [vmem:[%s143 + $0x48] sm:$0xff] %v236
      %479 = vst [vmem:[%s143 + $0x50] sm:$0xff] %v311
      %480 = vst [vmem:[%s143 + $0x58] sm:$0xff] %v313
      %481 = vst [vmem:[%s143 + $0x60] sm:$0xff] %v388
      %482 = vst [vmem:[%s143 + $0x68] sm:$0xff] %v390
      %483 = vst [vmem:[%s143 + $0x70] sm:$0xff] %v465
      %484 = vst [vmem:[%s143 + $0x78] sm:$0xff] %v467
      %p485 = scmp.lt.s32.totalorder %s13, 1
      %s486 = scalar_select %p485, %s13, 1
      %s487 = smul.addr %s486, 16
      %s488 = smul.addr %s487, 8
      %s489 = scalar_lea.vmem %s2, %s488
      // Predicated region
      $region29: #{deeplabv3_contrast_forward.4} parent=27 // pred_check
        %p490 = pneg %p78
      $region30: #{deeplabv3_contrast_forward.4} parent=27 // pred_check_branch
        %492 = sbr.rel (%p490) target = $region32
      $region31: #{deeplabv3_contrast_forward.4} parent=27 // pred_region
        _
      $region32: #{deeplabv3_contrast_forward.4} parent=27 // pred_fallthru
        _
    $region28: #{deeplabv3_contrast_forward.4} parent=5 // pred_fallthru
      _
    %p493 = scmp.le.s32.totalorder 2, %s8
    // Predicated region
    $region33: #{deeplabv3_contrast_forward.4} parent=5 // pred_check
      %p494 = pneg %p493
    $region34: #{deeplabv3_contrast_forward.4} parent=5 // pred_check_branch
      %496 = sbr.rel (%p494) target = $region36
    $region35: #{deeplabv3_contrast_forward.4} parent=5 // pred_region
      %s497 = ssub.s32 %s8, 2
      // Predicated region
      $region37: #{deeplabv3_contrast_forward.4} parent=35 // pred_check
        %p498 = pneg %p84
      $region38: #{deeplabv3_contrast_forward.4} parent=35 // pred_check_branch
        %500 = sbr.rel (%p498) target = $region40
      $region39: #{deeplabv3_contrast_forward.4} parent=35 // pred_region
        %p501 = scmp.lt.s32.totalorder %s14, 1
        %s502 = scalar_select %p501, %s14, 1
        %s503 = smul.addr %s502, 16
        %s504 = smul.addr %s503, 8
        %s505 = scalar_lea.vmem %s2, %s504
      $region40: #{deeplabv3_contrast_forward.4} parent=35 // pred_fallthru
        _
    $region36: #{deeplabv3_contrast_forward.4} parent=5 // pred_fallthru
      _
  $region6: #{deeplabv3_contrast_forward.4} parent=0 // loop_footer
    %s12 = sadd.s32 1, %s8
  $region7: #{deeplabv3_contrast_forward.4} parent=0 // loop_footer_branch
    %7 = sbr.rel target = $region3
  $region8: #{deeplabv3_contrast_forward.4} parent=0 // loop_exit
    _

// kernel: deeplabv3_contrast_forward.5
$region0: #{deeplabv3_contrast_forward.5}
  #allocation0 [shape = 'u32[]', space=smem, size = 0x4, offset = 0x4, fixed_abs, tag = 'smem constant byte address 0x4 - core index']
  #allocation1 [shape = 'u32[144,128]{1,0:T(1,128)}', space=vmem, size = 0x12000, scoped, tag = 'internal scratch']
  %s0 = inlined_call_operand.vmem [shape: f32[16,8], index: 0, kind: input, shape index: {}]
  %s1 = inlined_call_operand.vmem [shape: f32[32,8,128], index: 1, kind: input, shape index: {}]
  %s2 = inlined_call_operand.vmem [shape: f32[32,16,128], index: 2, kind: output, shape index: {}]
  %s3 = sld [smem:[#allocation0]]
  $region41: #{deeplabv3_contrast_forward.5} parent=0
    _
  %s5 = ssub.s32 1, %s3
  %s6 = scalar_select 0, %s5, %s3
  loop: start=0, step=1, limit=6
  $region2: #{deeplabv3_contrast_forward.5} parent=0 // loop_pre_header
    _
  $region3: #{deeplabv3_contrast_forward.5} parent=0 // loop_header
    %s8 = sphi 0, %s12
    %p9 = scmp.ge.s32.totalorder %s8, 6
    %s16 = sphi 0, %s16
    %s18 = sphi 0, %s16
    %s19 = sphi 0, %s18
    %s33 = sphi 0, %s19
    %s39 = sphi 0, %s41
    %s42 = sphi 0, %s39
    %s43 = sphi 0, %s42
    %s59 = sphi 0, %s43
    %s65 = sphi 0, %s67
    %s68 = sphi 0, %s65
    %s69 = sphi 0, %s68
    %s85 = sphi 0, %s69
  $region4: #{deeplabv3_contrast_forward.5} parent=0 // loop_header_branch
    %11 = sbr.rel (%p9) target = $region8
  $region5: #{deeplabv3_contrast_forward.5} parent=0 // loop_body
    %s13 = ssub.s32 %s8, 1
    %s14 = ssub.s32 %s8, 2
    %s15 = sadd.s32 %s8, 1
    %s17 = sadd.s32 %s16, 1
    %p20 = scmp.eq.s32.totalorder %s8, 3
    %p21 = scmp.ne.s32.totalorder %s16, %s18
    %p22 = scmp.eq.s32.totalorder %s8, 0
    %p23 = por %p21, %p22
    %p24 = scmp.ne.s32.totalorder %s16, %s18
    %p25 = scmp.eq.s32.totalorder %s13, 3
    %p26 = por %p24, %p25
    %p27 = scmp.ne.s32.totalorder %s18, %s19
    %p28 = scmp.eq.s32.totalorder %s13, 0
    %p29 = por %p27, %p28
    %p30 = scmp.ne.s32.totalorder %s18, %s19
    %p31 = scmp.eq.s32.totalorder %s14, 3
    %p32 = por %p30, %p31
    %p34 = scmp.ne.s32.totalorder %s19, %s33
    %p35 = scmp.eq.s32.totalorder %s14, 0
    %p36 = por %p34, %p35
    %s37 = ssub.s32 %s8, %s15
    %p38 = scmp.eq.s32.totalorder %s37, 0
    %s40 = sadd.s32 %s39, 1
    %s41 = scalar_select %p38, %s39, %s40
    %p44 = pneg %p38
    %p45 = scmp.eq.s32.totalorder %s8, 3
    %p46 = por %p44, %p45
    %p47 = scmp.ne.s32.totalorder %s39, %s42
    %p48 = scmp.eq.s32.totalorder %s8, 0
    %p49 = por %p47, %p48
    %p50 = scmp.ne.s32.totalorder %s39, %s42
    %p51 = scmp.eq.s32.totalorder %s13, 3
    %p52 = por %p50, %p51
    %p53 = scmp.ne.s32.totalorder %s42, %s43
    %p54 = scmp.eq.s32.totalorder %s13, 0
    %p55 = por %p53, %p54
    %p56 = scmp.ne.s32.totalorder %s42, %s43
    %p57 = scmp.eq.s32.totalorder %s14, 3
    %p58 = por %p56, %p57
    %p60 = scmp.ne.s32.totalorder %s43, %s59
    %p61 = scmp.eq.s32.totalorder %s14, 0
    %p62 = por %p60, %p61
    %s63 = ssub.s32 %s8, %s15
    %p64 = scmp.eq.s32.totalorder %s63, 0
    %s66 = sadd.s32 %s65, 1
    %s67 = scalar_select %p64, %s65, %s66
    %p70 = pneg %p64
    %p71 = scmp.eq.s32.totalorder %s8, 3
    %p72 = por %p70, %p71
    %p73 = scmp.ne.s32.totalorder %s65, %s68
    %p74 = scmp.eq.s32.totalorder %s8, 0
    %p75 = por %p73, %p74
    %p76 = scmp.ne.s32.totalorder %s65, %s68
    %p77 = scmp.eq.s32.totalorder %s13, 3
    %p78 = por %p76, %p77
    %p79 = scmp.ne.s32.totalorder %s68, %s69
    %p80 = scmp.eq.s32.totalorder %s13, 0
    %p81 = por %p79, %p80
    %p82 = scmp.ne.s32.totalorder %s68, %s69
    %p83 = scmp.eq.s32.totalorder %s14, 3
    %p84 = por %p82, %p83
    %p86 = scmp.ne.s32.totalorder %s69, %s85
    %p87 = scmp.eq.s32.totalorder %s14, 0
    %p88 = por %p86, %p87
    %p89 = scmp.le.s32.totalorder 1, %s8
    %p90 = scmp.lt.s32.totalorder %s8, 5
    %p91 = pnand %p89, %p90
    %p92 = pneg %p91
    // Predicated region
    $region9: #{deeplabv3_contrast_forward.5} parent=5 // pred_check
      _
    $region10: #{deeplabv3_contrast_forward.5} parent=5 // pred_check_branch
      %94 = sbr.rel (%p91) target = $region12
    $region11: #{deeplabv3_contrast_forward.5} parent=5 // pred_region
      %s95 = ssub.s32 %s8, 1
      // Predicated region
      $region13: #{deeplabv3_contrast_forward.5} parent=11 // pred_check
        %p96 = pneg %p29
      $region14: #{deeplabv3_contrast_forward.5} parent=11 // pred_check_branch
        %98 = sbr.rel (%p96) target = $region16
      $region15: #{deeplabv3_contrast_forward.5} parent=11 // pred_region
        _
      $region16: #{deeplabv3_contrast_forward.5} parent=11 // pred_fallthru
        _
    $region12: #{deeplabv3_contrast_forward.5} parent=5 // pred_fallthru
      _
    %p99 = scmp.lt.s32.totalorder %s8, 4
    // Predicated region
    $region17: #{deeplabv3_contrast_forward.5} parent=5 // pred_check
      %p100 = pneg %p99
    $region18: #{deeplabv3_contrast_forward.5} parent=5 // pred_check_branch
      %102 = sbr.rel (%p100) target = $region20
    $region19: #{deeplabv3_contrast_forward.5} parent=5 // pred_region
      // Predicated region
      $region21: #{deeplabv3_contrast_forward.5} parent=19 // pred_check
        %p103 = pneg %p49
      $region22: #{deeplabv3_contrast_forward.5} parent=19 // pred_check_branch
        %105 = sbr.rel (%p103) target = $region24
      $region23: #{deeplabv3_contrast_forward.5} parent=19 // pred_region
        %s106 = smul.u32 8, %s8
        %p107 = scmp.lt.s32.totalorder %s106, 31
        %s108 = scalar_select %p107, %s106, 31
        %s109 = smul.addr %s108, 8
        %s110 = scalar_lea.vmem %s1, %s109
        %s111 = smul.u32 8, %s8
      $region24: #{deeplabv3_contrast_forward.5} parent=19 // pred_fallthru
        _
    $region20: #{deeplabv3_contrast_forward.5} parent=5 // pred_fallthru
      _
    %p112 = scmp.le.s32.totalorder 1, %s8
    %p113 = scmp.lt.s32.totalorder %s8, 5
    %p114 = pnand %p112, %p113
    %p115 = pneg %p114
    // Predicated region
    $region25: #{deeplabv3_contrast_forward.5} parent=5 // pred_check
      _
    $region26: #{deeplabv3_contrast_forward.5} parent=5 // pred_check_branch
      %117 = sbr.rel (%p114) target = $region28
    $region27: #{deeplabv3_contrast_forward.5} parent=5 // pred_region
      %s118 = ssub.s32 %s8, 1
      %p119 = pneg %p29
      %p120 = pneg %p26
      %s121 = smul.u32 8, %s13
      %p122 = scmp.lt.s32.totalorder %s121, 31
      %s123 = scalar_select %p122, %s121, 31
      %s124 = smul.addr %s123, 8
      %s125 = scalar_lea.vmem %s1, %s124
      %p126 = pneg %p55
      %p127 = pneg %p52
      %p128 = pneg %p81
      %p129 = pneg %p78
      %s130 = smul.u32 8, %s13
      %p131 = scmp.lt.s32.totalorder %s130, 31
      %s132 = scalar_select %p131, %s130, 31
      %s133 = smul.addr %s132, 2
      %s134 = smul.addr %s133, 8
      %s135 = scalar_lea.vmem %s2, %s134
      %s136 = smul.u32 8, %s13
      %p137 = scmp.lt.s32.totalorder %s136, 31
      %s138 = scalar_select %p137, %s136, 31
      %s139 = smul.addr %s138, 8
      %s140 = scalar_lea.vmem %s1, %s139
      %s141 = smul.u32 8, %s13
      %s142 = smul.u32 8, %s13
      %p143 = scmp.lt.s32.totalorder %s142, 31
      %s144 = scalar_select %p143, %s142, 31
      %s145 = smul.addr %s144, 2
      %s146 = smul.addr %s145, 8
      %s147 = scalar_lea.vmem %s2, %s146
      %s148 = smul.u32 8, %s13
      %v149 = vld [vmem:[%s0] sm:$0xff]
      %v150 = vld [vmem:[%s0 + $0x8] sm:$0xff]
      %v151 = vld [vmem:[%s140] sm:$0xff]
      %vm152 = vcmask 64512
      %v154 = vsel %vm152, %v149, 0
      %v157 = vsel %vm152, %v150, 0
      %159 = vmatprep.subr.mxu0 0.0
      %160 = vmatpush1.msra.mxu0 %v151
      %161 = vmatprep.subr.mxu0 0.0
      %162 = vmatpush1.msra.mxu0 0.0
      %163 = vmatprep.subr.mxu0 0.0
      %164 = vmatpush1.msra.mxu0 0.0
      %165 = vmatprep.subr.mxu0 0.0
      %166 = vmatpush1.msra.mxu0 0.0
      %167 = vmatprep.subr.mxu0 0.0
      %168 = vmatpush1.msra.mxu0 0.0
      %169 = vmatprep.subr.mxu0 0.0
      %170 = vmatpush1.msra.mxu0 0.0
      %171 = vmatprep.subr.mxu0 0.0
      %172 = vmatpush1.msra.mxu0 0.0
      %173 = vmatprep.subr.mxu0 0.0
      %174 = vmatpush1.msra.mxu0 0.0
      %175 = vmatprep.subr.mxu0 0.0
      %176 = vmatpush1.msra.mxu0 0.0
      %177 = vmatprep.subr.mxu0 0.0
      %178 = vmatpush1.msra.mxu0 0.0
      %179 = vmatprep.subr.mxu0 0.0
      %180 = vmatpush1.msra.mxu0 0.0
      %181 = vmatprep.subr.mxu0 0.0
      %182 = vmatpush1.msra.mxu0 0.0
      %183 = vmatprep.subr.mxu0 0.0
      %184 = vmatpush1.msra.mxu0 0.0
      %185 = vmatprep.subr.mxu0 0.0
      %186 = vmatpush1.msra.mxu0 0.0
      %187 = vmatprep.subr.mxu0 0.0
      %188 = vmatpush1.msra.mxu0 0.0
      %189 = vmatprep.subr.mxu0 0.0
      %190 = vmatpush1.msra.mxu0 0.0
      %191 = vmatprep.subr.mxu0 0.0
      %192 = vmatpush1.msra.mxu0 0.0
      %193 = vmatprep.subr.mxu0 0.0
      %194 = vmatpush1.msra.mxu0 0.0
      %195 = vmatprep.subr.mxu0 0.0
      %196 = vmatpush1.msra.mxu0 0.0
      %197 = vmatprep.subr.mxu0 0.0
      %198 = vmatpush1.msra.mxu0 0.0
      %199 = vmatprep.subr.mxu0 0.0
      %200 = vmatpush1.msra.mxu0 0.0
      %201 = vmatprep.subr.mxu0 0.0
      %202 = vmatpush1.msra.mxu0 0.0
      %203 = vmatprep.subr.mxu0 0.0
      %204 = vmatpush1.msra.mxu0 0.0
      %205 = vmatprep.subr.mxu0 0.0
      %206 = vmatpush1.msra.mxu0 0.0
      %207 = vmatprep.subr.mxu0 0.0
      %208 = vmatpush1.msra.mxu0 0.0
      %209 = vmatprep.subr.mxu0 0.0
      %210 = vmatpush1.msra.mxu0 0.0
      %211 = vmatprep.subr.mxu0 0.0
      %212 = vmatpush1.msra.mxu0 0.0
      %213 = vmatprep.subr.mxu0 0.0
      %214 = vmatpush1.msra.mxu0 0.0
      %215 = vmatprep.subr.mxu0 0.0
      %216 = vmatpush1.msra.mxu0 0.0
      %217 = vmatprep.subr.mxu0 0.0
      %218 = vmatpush1.msra.mxu0 0.0
      %219 = vmatprep.subr.mxu0 0.0
      %220 = vmatpush1.msra.mxu0 0.0
      %221 = vmatprep.subr.mxu0 0.0
      %222 = vmatpush1.msra.mxu0 0.0
      %223 = vmatprep.mubr.f32.mxu0 0.0
      %224 = vmatmul.mubr.f32.gmra.mrb[0].mxu0 %v154
      %v225 = vpop.f32.mrb[0].mxu0
      %v226 = vadd.f32 0.0, %v225
      %v227 = vpop.f32.mrb[0].mxu0
      %228 = vmatprep.mubr.f32.mxu0 0.0
      %229 = vmatmul.mubr.f32.gmra.mrb[0].mxu0 %v157
      %v230 = vpop.f32.mrb[0].mxu0
      %v231 = vadd.f32 0.0, %v230
      %v232 = vpop.f32.mrb[0].mxu0
      %233 = vdwg.mxu0
      %234 = vst [vmem:[%s147] sm:$0xff] %v226
      %235 = vst [vmem:[%s147 + $0x8] sm:$0xff] %v231
      %s236 = scalar_lea.vmem %s140, 8
      %v237 = vld [vmem:[%s236] sm:$0xff]
      %238 = vmatprep.subr.mxu0 0.0
      %239 = vmatpush1.msra.mxu0 %v237
      %240 = vmatprep.subr.mxu0 0.0
      %241 = vmatpush1.msra.mxu0 0.0
      %242 = vmatprep.subr.mxu0 0.0
      %243 = vmatpush1.msra.mxu0 0.0
      %244 = vmatprep.subr.mxu0 0.0
      %245 = vmatpush1.msra.mxu0 0.0
      %246 = vmatprep.subr.mxu0 0.0
      %247 = vmatpush1.msra.mxu0 0.0
      %248 = vmatprep.subr.mxu0 0.0
      %249 = vmatpush1.msra.mxu0 0.0
      %250 = vmatprep.subr.mxu0 0.0
      %251 = vmatpush1.msra.mxu0 0.0
      %252 = vmatprep.subr.mxu0 0.0
      %253 = vmatpush1.msra.mxu0 0.0
      %254 = vmatprep.subr.mxu0 0.0
      %255 = vmatpush1.msra.mxu0 0.0
      %256 = vmatprep.subr.mxu0 0.0
      %257 = vmatpush1.msra.mxu0 0.0
      %258 = vmatprep.subr.mxu0 0.0
      %259 = vmatpush1.msra.mxu0 0.0
      %260 = vmatprep.subr.mxu0 0.0
      %261 = vmatpush1.msra.mxu0 0.0
      %262 = vmatprep.subr.mxu0 0.0
      %263 = vmatpush1.msra.mxu0 0.0
      %264 = vmatprep.subr.mxu0 0.0
      %265 = vmatpush1.msra.mxu0 0.0
      %266 = vmatprep.subr.mxu0 0.0
      %267 = vmatpush1.msra.mxu0 0.0
      %268 = vmatprep.subr.mxu0 0.0
      %269 = vmatpush1.msra.mxu0 0.0
      %270 = vmatprep.subr.mxu0 0.0
      %271 = vmatpush1.msra.mxu0 0.0
      %272 = vmatprep.subr.mxu0 0.0
      %273 = vmatpush1.msra.mxu0 0.0
      %274 = vmatprep.subr.mxu0 0.0
      %275 = vmatpush1.msra.mxu0 0.0
      %276 = vmatprep.subr.mxu0 0.0
      %277 = vmatpush1.msra.mxu0 0.0
      %278 = vmatprep.subr.mxu0 0.0
      %279 = vmatpush1.msra.mxu0 0.0
      %280 = vmatprep.subr.mxu0 0.0
      %281 = vmatpush1.msra.mxu0 0.0
      %282 = vmatprep.subr.mxu0 0.0
      %283 = vmatpush1.msra.mxu0 0.0
      %284 = vmatprep.subr.mxu0 0.0
      %285 = vmatpush1.msra.mxu0 0.0
      %286 = vmatprep.subr.mxu0 0.0
      %287 = vmatpush1.msra.mxu0 0.0
      %288 = vmatprep.subr.mxu0 0.0
      %289 = vmatpush1.msra.mxu0 0.0
      %290 = vmatprep.subr.mxu0 0.0
      %291 = vmatpush1.msra.mxu0 0.0
      %292 = vmatprep.subr.mxu0 0.0
      %293 = vmatpush1.msra.mxu0 0.0
      %294 = vmatprep.subr.mxu0 0.0
      %295 = vmatpush1.msra.mxu0 0.0
      %296 = vmatprep.subr.mxu0 0.0
      %297 = vmatpush1.msra.mxu0 0.0
      %298 = vmatprep.subr.mxu0 0.0
      %299 = vmatpush1.msra.mxu0 0.0
      %300 = vmatprep.subr.mxu0 0.0
      %301 = vmatpush1.msra.mxu0 0.0
      %302 = vmatprep.mubr.f32.mxu0 0.0
      %303 = vmatmul.mubr.f32.gmra.mrb[0].mxu0 %v154
      %v304 = vpop.f32.mrb[0].mxu0
      %v305 = vadd.f32 0.0, %v304
      %v306 = vpop.f32.mrb[0].mxu0
      %307 = vmatprep.mubr.f32.mxu0 0.0
      %308 = vmatmul.mubr.f32.gmra.mrb[0].mxu0 %v157
      %v309 = vpop.f32.mrb[0].mxu0
      %v310 = vadd.f32 0.0, %v309
      %v311 = vpop.f32.mrb[0].mxu0
      %312 = vdwg.mxu0
      %s313 = scalar_lea.vmem %s147, 16
      %314 = vst [vmem:[%s313] sm:$0xff] %v305
      %315 = vst [vmem:[%s313 + $0x8] sm:$0xff] %v310
      %s316 = scalar_lea.vmem %s140, 16
      %v317 = vld [vmem:[%s316] sm:$0xff]
      %318 = vmatprep.subr.mxu0 0.0
      %319 = vmatpush1.msra.mxu0 %v317
      %320 = vmatprep.subr.mxu0 0.0
      %321 = vmatpush1.msra.mxu0 0.0
      %322 = vmatprep.subr.mxu0 0.0
      %323 = vmatpush1.msra.mxu0 0.0
      %324 = vmatprep.subr.mxu0 0.0
      %325 = vmatpush1.msra.mxu0 0.0
      %326 = vmatprep.subr.mxu0 0.0
      %327 = vmatpush1.msra.mxu0 0.0
      %328 = vmatprep.subr.mxu0 0.0
      %329 = vmatpush1.msra.mxu0 0.0
      %330 = vmatprep.subr.mxu0 0.0
      %331 = vmatpush1.msra.mxu0 0.0
      %332 = vmatprep.subr.mxu0 0.0
      %333 = vmatpush1.msra.mxu0 0.0
      %334 = vmatprep.subr.mxu0 0.0
      %335 = vmatpush1.msra.mxu0 0.0
      %336 = vmatprep.subr.mxu0 0.0
      %337 = vmatpush1.msra.mxu0 0.0
      %338 = vmatprep.subr.mxu0 0.0
      %339 = vmatpush1.msra.mxu0 0.0
      %340 = vmatprep.subr.mxu0 0.0
      %341 = vmatpush1.msra.mxu0 0.0
      %342 = vmatprep.subr.mxu0 0.0
      %343 = vmatpush1.msra.mxu0 0.0
      %344 = vmatprep.subr.mxu0 0.0
      %345 = vmatpush1.msra.mxu0 0.0
      %346 = vmatprep.subr.mxu0 0.0
      %347 = vmatpush1.msra.mxu0 0.0
      %348 = vmatprep.subr.mxu0 0.0
      %349 = vmatpush1.msra.mxu0 0.0
      %350 = vmatprep.subr.mxu0 0.0
      %351 = vmatpush1.msra.mxu0 0.0
      %352 = vmatprep.subr.mxu0 0.0
      %353 = vmatpush1.msra.mxu0 0.0
      %354 = vmatprep.subr.mxu0 0.0
      %355 = vmatpush1.msra.mxu0 0.0
      %356 = vmatprep.subr.mxu0 0.0
      %357 = vmatpush1.msra.mxu0 0.0
      %358 = vmatprep.subr.mxu0 0.0
      %359 = vmatpush1.msra.mxu0 0.0
      %360 = vmatprep.subr.mxu0 0.0
      %361 = vmatpush1.msra.mxu0 0.0
      %362 = vmatprep.subr.mxu0 0.0
      %363 = vmatpush1.msra.mxu0 0.0
      %364 = vmatprep.subr.mxu0 0.0
      %365 = vmatpush1.msra.mxu0 0.0
      %366 = vmatprep.subr.mxu0 0.0
      %367 = vmatpush1.msra.mxu0 0.0
      %368 = vmatprep.subr.mxu0 0.0
      %369 = vmatpush1.msra.mxu0 0.0
      %370 = vmatprep.subr.mxu0 0.0
      %371 = vmatpush1.msra.mxu0 0.0
      %372 = vmatprep.subr.mxu0 0.0
      %373 = vmatpush1.msra.mxu0 0.0
      %374 = vmatprep.subr.mxu0 0.0
      %375 = vmatpush1.msra.mxu0 0.0
      %376 = vmatprep.subr.mxu0 0.0
      %377 = vmatpush1.msra.mxu0 0.0
      %378 = vmatprep.subr.mxu0 0.0
      %379 = vmatpush1.msra.mxu0 0.0
      %380 = vmatprep.subr.mxu0 0.0
      %381 = vmatpush1.msra.mxu0 0.0
      %382 = vmatprep.mubr.f32.mxu0 0.0
      %383 = vmatmul.mubr.f32.gmra.mrb[0].mxu0 %v154
      %v384 = vpop.f32.mrb[0].mxu0
      %v385 = vadd.f32 0.0, %v384
      %v386 = vpop.f32.mrb[0].mxu0
      %387 = vmatprep.mubr.f32.mxu0 0.0
      %388 = vmatmul.mubr.f32.gmra.mrb[0].mxu0 %v157
      %v389 = vpop.f32.mrb[0].mxu0
      %v390 = vadd.f32 0.0, %v389
      %v391 = vpop.f32.mrb[0].mxu0
      %392 = vdwg.mxu0
      %s393 = scalar_lea.vmem %s147, 32
      %394 = vst [vmem:[%s393] sm:$0xff] %v385
      %395 = vst [vmem:[%s393 + $0x8] sm:$0xff] %v390
      %s396 = scalar_lea.vmem %s140, 24
      %v397 = vld [vmem:[%s396] sm:$0xff]
      %398 = vmatprep.subr.mxu0 0.0
      %399 = vmatpush1.msra.mxu0 %v397
      %400 = vmatprep.subr.mxu0 0.0
      %401 = vmatpush1.msra.mxu0 0.0
      %402 = vmatprep.subr.mxu0 0.0
      %403 = vmatpush1.msra.mxu0 0.0
      %404 = vmatprep.subr.mxu0 0.0
      %405 = vmatpush1.msra.mxu0 0.0
      %406 = vmatprep.subr.mxu0 0.0
      %407 = vmatpush1.msra.mxu0 0.0
      %408 = vmatprep.subr.mxu0 0.0
      %409 = vmatpush1.msra.mxu0 0.0
      %410 = vmatprep.subr.mxu0 0.0
      %411 = vmatpush1.msra.mxu0 0.0
      %412 = vmatprep.subr.mxu0 0.0
      %413 = vmatpush1.msra.mxu0 0.0
      %414 = vmatprep.subr.mxu0 0.0
      %415 = vmatpush1.msra.mxu0 0.0
      %416 = vmatprep.subr.mxu0 0.0
      %417 = vmatpush1.msra.mxu0 0.0
      %418 = vmatprep.subr.mxu0 0.0
      %419 = vmatpush1.msra.mxu0 0.0
      %420 = vmatprep.subr.mxu0 0.0
      %421 = vmatpush1.msra.mxu0 0.0
      %422 = vmatprep.subr.mxu0 0.0
      %423 = vmatpush1.msra.mxu0 0.0
      %424 = vmatprep.subr.mxu0 0.0
      %425 = vmatpush1.msra.mxu0 0.0
      %426 = vmatprep.subr.mxu0 0.0
      %427 = vmatpush1.msra.mxu0 0.0
      %428 = vmatprep.subr.mxu0 0.0
      %429 = vmatpush1.msra.mxu0 0.0
      %430 = vmatprep.subr.mxu0 0.0
      %431 = vmatpush1.msra.mxu0 0.0
      %432 = vmatprep.subr.mxu0 0.0
      %433 = vmatpush1.msra.mxu0 0.0
      %434 = vmatprep.subr.mxu0 0.0
      %435 = vmatpush1.msra.mxu0 0.0
      %436 = vmatprep.subr.mxu0 0.0
      %437 = vmatpush1.msra.mxu0 0.0
      %438 = vmatprep.subr.mxu0 0.0
      %439 = vmatpush1.msra.mxu0 0.0
      %440 = vmatprep.subr.mxu0 0.0
      %441 = vmatpush1.msra.mxu0 0.0
      %442 = vmatprep.subr.mxu0 0.0
      %443 = vmatpush1.msra.mxu0 0.0
      %444 = vmatprep.subr.mxu0 0.0
      %445 = vmatpush1.msra.mxu0 0.0
      %446 = vmatprep.subr.mxu0 0.0
      %447 = vmatpush1.msra.mxu0 0.0
      %448 = vmatprep.subr.mxu0 0.0
      %449 = vmatpush1.msra.mxu0 0.0
      %450 = vmatprep.subr.mxu0 0.0
      %451 = vmatpush1.msra.mxu0 0.0
      %452 = vmatprep.subr.mxu0 0.0
      %453 = vmatpush1.msra.mxu0 0.0
      %454 = vmatprep.subr.mxu0 0.0
      %455 = vmatpush1.msra.mxu0 0.0
      %456 = vmatprep.subr.mxu0 0.0
      %457 = vmatpush1.msra.mxu0 0.0
      %458 = vmatprep.subr.mxu0 0.0
      %459 = vmatpush1.msra.mxu0 0.0
      %460 = vmatprep.subr.mxu0 0.0
      %461 = vmatpush1.msra.mxu0 0.0
      %462 = vmatprep.mubr.f32.mxu0 0.0
      %463 = vmatmul.mubr.f32.gmra.mrb[0].mxu0 %v154
      %v464 = vpop.f32.mrb[0].mxu0
      %v465 = vadd.f32 0.0, %v464
      %v466 = vpop.f32.mrb[0].mxu0
      %467 = vmatprep.mubr.f32.mxu0 0.0
      %468 = vmatmul.mubr.f32.gmra.mrb[0].mxu0 %v157
      %v469 = vpop.f32.mrb[0].mxu0
      %v470 = vadd.f32 0.0, %v469
      %v471 = vpop.f32.mrb[0].mxu0
      %472 = vdwg.mxu0
      %s473 = scalar_lea.vmem %s147, 48
      %474 = vst [vmem:[%s473] sm:$0xff] %v465
      %475 = vst [vmem:[%s473 + $0x8] sm:$0xff] %v470
      %s476 = scalar_lea.vmem %s140, 32
      %v477 = vld [vmem:[%s476] sm:$0xff]
      %478 = vmatprep.subr.mxu0 0.0
      %479 = vmatpush1.msra.mxu0 %v477
      %480 = vmatprep.subr.mxu0 0.0
      %481 = vmatpush1.msra.mxu0 0.0
      %482 = vmatprep.subr.mxu0 0.0
      %483 = vmatpush1.msra.mxu0 0.0
      %484 = vmatprep.subr.mxu0 0.0
      %485 = vmatpush1.msra.mxu0 0.0
      %486 = vmatprep.subr.mxu0 0.0
      %487 = vmatpush1.msra.mxu0 0.0
      %488 = vmatprep.subr.mxu0 0.0
      %489 = vmatpush1.msra.mxu0 0.0
      %490 = vmatprep.subr.mxu0 0.0
      %491 = vmatpush1.msra.mxu0 0.0
      %492 = vmatprep.subr.mxu0 0.0
      %493 = vmatpush1.msra.mxu0 0.0
      %494 = vmatprep.subr.mxu0 0.0
      %495 = vmatpush1.msra.mxu0 0.0
      %496 = vmatprep.subr.mxu0 0.0
      %497 = vmatpush1.msra.mxu0 0.0
      %498 = vmatprep.subr.mxu0 0.0
      %499 = vmatpush1.msra.mxu0 0.0
      %500 = vmatprep.subr.mxu0 0.0
      %501 = vmatpush1.msra.mxu0 0.0
      %502 = vmatprep.subr.mxu0 0.0
      %503 = vmatpush1.msra.mxu0 0.0
      %504 = vmatprep.subr.mxu0 0.0
      %505 = vmatpush1.msra.mxu0 0.0
      %506 = vmatprep.subr.mxu0 0.0
      %507 = vmatpush1.msra.mxu0 0.0
      %508 = vmatprep.subr.mxu0 0.0
      %509 = vmatpush1.msra.mxu0 0.0
      %510 = vmatprep.subr.mxu0 0.0
      %511 = vmatpush1.msra.mxu0 0.0
      %512 = vmatprep.subr.mxu0 0.0
      %513 = vmatpush1.msra.mxu0 0.0
      %514 = vmatprep.subr.mxu0 0.0
      %515 = vmatpush1.msra.mxu0 0.0
      %516 = vmatprep.subr.mxu0 0.0
      %517 = vmatpush1.msra.mxu0 0.0
      %518 = vmatprep.subr.mxu0 0.0
      %519 = vmatpush1.msra.mxu0 0.0
      %520 = vmatprep.subr.mxu0 0.0
      %521 = vmatpush1.msra.mxu0 0.0
      %522 = vmatprep.subr.mxu0 0.0
      %523 = vmatpush1.msra.mxu0 0.0
      %524 = vmatprep.subr.mxu0 0.0
      %525 = vmatpush1.msra.mxu0 0.0
      %526 = vmatprep.subr.mxu0 0.0
      %527 = vmatpush1.msra.mxu0 0.0
      %528 = vmatprep.subr.mxu0 0.0
      %529 = vmatpush1.msra.mxu0 0.0
      %530 = vmatprep.subr.mxu0 0.0
      %531 = vmatpush1.msra.mxu0 0.0
      %532 = vmatprep.subr.mxu0 0.0
      %533 = vmatpush1.msra.mxu0 0.0
      %534 = vmatprep.subr.mxu0 0.0
      %535 = vmatpush1.msra.mxu0 0.0
      %536 = vmatprep.subr.mxu0 0.0
      %537 = vmatpush1.msra.mxu0 0.0
      %538 = vmatprep.subr.mxu0 0.0
      %539 = vmatpush1.msra.mxu0 0.0
      %540 = vmatprep.subr.mxu0 0.0
      %541 = vmatpush1.msra.mxu0 0.0
      %542 = vmatprep.mubr.f32.mxu0 0.0
      %543 = vmatmul.mubr.f32.gmra.mrb[0].mxu0 %v154
      %v544 = vpop.f32.mrb[0].mxu0
      %v545 = vadd.f32 0.0, %v544
      %v546 = vpop.f32.mrb[0].mxu0
      %547 = vmatprep.mubr.f32.mxu0 0.0
      %548 = vmatmul.mubr.f32.gmra.mrb[0].mxu0 %v157
      %v549 = vpop.f32.mrb[0].mxu0
      %v550 = vadd.f32 0.0, %v549
      %v551 = vpop.f32.mrb[0].mxu0
      %552 = vdwg.mxu0
      %s553 = scalar_lea.vmem %s147, 64
      %554 = vst [vmem:[%s553] sm:$0xff] %v545
      %555 = vst [vmem:[%s553 + $0x8] sm:$0xff] %v550
      %s556 = scalar_lea.vmem %s140, 40
      %v557 = vld [vmem:[%s556] sm:$0xff]
      %558 = vmatprep.subr.mxu0 0.0
      %559 = vmatpush1.msra.mxu0 %v557
      %560 = vmatprep.subr.mxu0 0.0
      %561 = vmatpush1.msra.mxu0 0.0
      %562 = vmatprep.subr.mxu0 0.0
      %563 = vmatpush1.msra.mxu0 0.0
      %564 = vmatprep.subr.mxu0 0.0
      %565 = vmatpush1.msra.mxu0 0.0
      %566 = vmatprep.subr.mxu0 0.0
      %567 = vmatpush1.msra.mxu0 0.0
      %568 = vmatprep.subr.mxu0 0.0
      %569 = vmatpush1.msra.mxu0 0.0
      %570 = vmatprep.subr.mxu0 0.0
      %571 = vmatpush1.msra.mxu0 0.0
      %572 = vmatprep.subr.mxu0 0.0
      %573 = vmatpush1.msra.mxu0 0.0
      %574 = vmatprep.subr.mxu0 0.0
      %575 = vmatpush1.msra.mxu0 0.0
      %576 = vmatprep.subr.mxu0 0.0
      %577 = vmatpush1.msra.mxu0 0.0
      %578 = vmatprep.subr.mxu0 0.0
      %579 = vmatpush1.msra.mxu0 0.0
      %580 = vmatprep.subr.mxu0 0.0
      %581 = vmatpush1.msra.mxu0 0.0
      %582 = vmatprep.subr.mxu0 0.0
      %583 = vmatpush1.msra.mxu0 0.0
      %584 = vmatprep.subr.mxu0 0.0
      %585 = vmatpush1.msra.mxu0 0.0
      %586 = vmatprep.subr.mxu0 0.0
      %587 = vmatpush1.msra.mxu0 0.0
      %588 = vmatprep.subr.mxu0 0.0
      %589 = vmatpush1.msra.mxu0 0.0
      %590 = vmatprep.subr.mxu0 0.0
      %591 = vmatpush1.msra.mxu0 0.0
      %592 = vmatprep.subr.mxu0 0.0
      %593 = vmatpush1.msra.mxu0 0.0
      %594 = vmatprep.subr.mxu0 0.0
      %595 = vmatpush1.msra.mxu0 0.0
      %596 = vmatprep.subr.mxu0 0.0
      %597 = vmatpush1.msra.mxu0 0.0
      %598 = vmatprep.subr.mxu0 0.0
      %599 = vmatpush1.msra.mxu0 0.0
      %600 = vmatprep.subr.mxu0 0.0
      %601 = vmatpush1.msra.mxu0 0.0
      %602 = vmatprep.subr.mxu0 0.0
      %603 = vmatpush1.msra.mxu0 0.0
      %604 = vmatprep.subr.mxu0 0.0
      %605 = vmatpush1.msra.mxu0 0.0
      %606 = vmatprep.subr.mxu0 0.0
      %607 = vmatpush1.msra.mxu0 0.0
      %608 = vmatprep.subr.mxu0 0.0
      %609 = vmatpush1.msra.mxu0 0.0
      %610 = vmatprep.subr.mxu0 0.0
      %611 = vmatpush1.msra.mxu0 0.0
      %612 = vmatprep.subr.mxu0 0.0
      %613 = vmatpush1.msra.mxu0 0.0
      %614 = vmatprep.subr.mxu0 0.0
      %615 = vmatpush1.msra.mxu0 0.0
      %616 = vmatprep.subr.mxu0 0.0
      %617 = vmatpush1.msra.mxu0 0.0
      %618 = vmatprep.subr.mxu0 0.0
      %619 = vmatpush1.msra.mxu0 0.0
      %620 = vmatprep.subr.mxu0 0.0
      %621 = vmatpush1.msra.mxu0 0.0
      %622 = vmatprep.mubr.f32.mxu0 0.0
      %623 = vmatmul.mubr.f32.gmra.mrb[0].mxu0 %v154
      %v624 = vpop.f32.mrb[0].mxu0
      %v625 = vadd.f32 0.0, %v624
      %v626 = vpop.f32.mrb[0].mxu0
      %627 = vmatprep.mubr.f32.mxu0 0.0
      %628 = vmatmul.mubr.f32.gmra.mrb[0].mxu0 %v157
      %v629 = vpop.f32.mrb[0].mxu0
      %v630 = vadd.f32 0.0, %v629
      %v631 = vpop.f32.mrb[0].mxu0
      %632 = vdwg.mxu0
      %s633 = scalar_lea.vmem %s147, 80
      %634 = vst [vmem:[%s633] sm:$0xff] %v625
      %635 = vst [vmem:[%s633 + $0x8] sm:$0xff] %v630
      %s636 = scalar_lea.vmem %s140, 48
      %v637 = vld [vmem:[%s636] sm:$0xff]
      %638 = vmatprep.subr.mxu0 0.0
      %639 = vmatpush1.msra.mxu0 %v637
      %640 = vmatprep.subr.mxu0 0.0
      %641 = vmatpush1.msra.mxu0 0.0
      %642 = vmatprep.subr.mxu0 0.0
      %643 = vmatpush1.msra.mxu0 0.0
      %644 = vmatprep.subr.mxu0 0.0
      %645 = vmatpush1.msra.mxu0 0.0
      %646 = vmatprep.subr.mxu0 0.0
      %647 = vmatpush1.msra.mxu0 0.0
      %648 = vmatprep.subr.mxu0 0.0
      %649 = vmatpush1.msra.mxu0 0.0
      %650 = vmatprep.subr.mxu0 0.0
      %651 = vmatpush1.msra.mxu0 0.0
      %652 = vmatprep.subr.mxu0 0.0
      %653 = vmatpush1.msra.mxu0 0.0
      %654 = vmatprep.subr.mxu0 0.0
      %655 = vmatpush1.msra.mxu0 0.0
      %656 = vmatprep.subr.mxu0 0.0
      %657 = vmatpush1.msra.mxu0 0.0
      %658 = vmatprep.subr.mxu0 0.0
      %659 = vmatpush1.msra.mxu0 0.0
      %660 = vmatprep.subr.mxu0 0.0
      %661 = vmatpush1.msra.mxu0 0.0
      %662 = vmatprep.subr.mxu0 0.0
      %663 = vmatpush1.msra.mxu0 0.0
      %664 = vmatprep.subr.mxu0 0.0
      %665 = vmatpush1.msra.mxu0 0.0
      %666 = vmatprep.subr.mxu0 0.0
      %667 = vmatpush1.msra.mxu0 0.0
      %668 = vmatprep.subr.mxu0 0.0
      %669 = vmatpush1.msra.mxu0 0.0
      %670 = vmatprep.subr.mxu0 0.0
      %671 = vmatpush1.msra.mxu0 0.0
      %672 = vmatprep.subr.mxu0 0.0
      %673 = vmatpush1.msra.mxu0 0.0
      %674 = vmatprep.subr.mxu0 0.0
      %675 = vmatpush1.msra.mxu0 0.0
      %676 = vmatprep.subr.mxu0 0.0
      %677 = vmatpush1.msra.mxu0 0.0
      %678 = vmatprep.subr.mxu0 0.0
      %679 = vmatpush1.msra.mxu0 0.0
      %680 = vmatprep.subr.mxu0 0.0
      %681 = vmatpush1.msra.mxu0 0.0
      %682 = vmatprep.subr.mxu0 0.0
      %683 = vmatpush1.msra.mxu0 0.0
      %684 = vmatprep.subr.mxu0 0.0
      %685 = vmatpush1.msra.mxu0 0.0
      %686 = vmatprep.subr.mxu0 0.0
      %687 = vmatpush1.msra.mxu0 0.0
      %688 = vmatprep.subr.mxu0 0.0
      %689 = vmatpush1.msra.mxu0 0.0
      %690 = vmatprep.subr.mxu0 0.0
      %691 = vmatpush1.msra.mxu0 0.0
      %692 = vmatprep.subr.mxu0 0.0
      %693 = vmatpush1.msra.mxu0 0.0
      %694 = vmatprep.subr.mxu0 0.0
      %695 = vmatpush1.msra.mxu0 0.0
      %696 = vmatprep.subr.mxu0 0.0
      %697 = vmatpush1.msra.mxu0 0.0
      %698 = vmatprep.subr.mxu0 0.0
      %699 = vmatpush1.msra.mxu0 0.0
      %700 = vmatprep.subr.mxu0 0.0
      %701 = vmatpush1.msra.mxu0 0.0
      %702 = vmatprep.mubr.f32.mxu0 0.0
      %703 = vmatmul.mubr.f32.gmra.mrb[0].mxu0 %v154
      %v704 = vpop.f32.mrb[0].mxu0
      %v705 = vadd.f32 0.0, %v704
      %v706 = vpop.f32.mrb[0].mxu0
      %707 = vmatprep.mubr.f32.mxu0 0.0
      %708 = vmatmul.mubr.f32.gmra.mrb[0].mxu0 %v157
      %v709 = vpop.f32.mrb[0].mxu0
      %v710 = vadd.f32 0.0, %v709
      %v711 = vpop.f32.mrb[0].mxu0
      %712 = vdwg.mxu0
      %s713 = scalar_lea.vmem %s147, 96
      %714 = vst [vmem:[%s713] sm:$0xff] %v705
      %715 = vst [vmem:[%s713 + $0x8] sm:$0xff] %v710
      %s716 = scalar_lea.vmem %s140, 56
      %v717 = vld [vmem:[%s716] sm:$0xff]
      %718 = vmatprep.subr.mxu0 0.0
      %719 = vmatpush1.msra.mxu0 %v717
      %720 = vmatprep.subr.mxu0 0.0
      %721 = vmatpush1.msra.mxu0 0.0
      %722 = vmatprep.subr.mxu0 0.0
      %723 = vmatpush1.msra.mxu0 0.0
      %724 = vmatprep.subr.mxu0 0.0
      %725 = vmatpush1.msra.mxu0 0.0
      %726 = vmatprep.subr.mxu0 0.0
      %727 = vmatpush1.msra.mxu0 0.0
      %728 = vmatprep.subr.mxu0 0.0
      %729 = vmatpush1.msra.mxu0 0.0
      %730 = vmatprep.subr.mxu0 0.0
      %731 = vmatpush1.msra.mxu0 0.0
      %732 = vmatprep.subr.mxu0 0.0
      %733 = vmatpush1.msra.mxu0 0.0
      %734 = vmatprep.subr.mxu0 0.0
      %735 = vmatpush1.msra.mxu0 0.0
      %736 = vmatprep.subr.mxu0 0.0
      %737 = vmatpush1.msra.mxu0 0.0
      %738 = vmatprep.subr.mxu0 0.0
      %739 = vmatpush1.msra.mxu0 0.0
      %740 = vmatprep.subr.mxu0 0.0
      %741 = vmatpush1.msra.mxu0 0.0
      %742 = vmatprep.subr.mxu0 0.0
      %743 = vmatpush1.msra.mxu0 0.0
      %744 = vmatprep.subr.mxu0 0.0
      %745 = vmatpush1.msra.mxu0 0.0
      %746 = vmatprep.subr.mxu0 0.0
      %747 = vmatpush1.msra.mxu0 0.0
      %748 = vmatprep.subr.mxu0 0.0
      %749 = vmatpush1.msra.mxu0 0.0
      %750 = vmatprep.subr.mxu0 0.0
      %751 = vmatpush1.msra.mxu0 0.0
      %752 = vmatprep.subr.mxu0 0.0
      %753 = vmatpush1.msra.mxu0 0.0
      %754 = vmatprep.subr.mxu0 0.0
      %755 = vmatpush1.msra.mxu0 0.0
      %756 = vmatprep.subr.mxu0 0.0
      %757 = vmatpush1.msra.mxu0 0.0
      %758 = vmatprep.subr.mxu0 0.0
      %759 = vmatpush1.msra.mxu0 0.0
      %760 = vmatprep.subr.mxu0 0.0
      %761 = vmatpush1.msra.mxu0 0.0
      %762 = vmatprep.subr.mxu0 0.0
      %763 = vmatpush1.msra.mxu0 0.0
      %764 = vmatprep.subr.mxu0 0.0
      %765 = vmatpush1.msra.mxu0 0.0
      %766 = vmatprep.subr.mxu0 0.0
      %767 = vmatpush1.msra.mxu0 0.0
      %768 = vmatprep.subr.mxu0 0.0
      %769 = vmatpush1.msra.mxu0 0.0
      %770 = vmatprep.subr.mxu0 0.0
      %771 = vmatpush1.msra.mxu0 0.0
      %772 = vmatprep.subr.mxu0 0.0
      %773 = vmatpush1.msra.mxu0 0.0
      %774 = vmatprep.subr.mxu0 0.0
      %775 = vmatpush1.msra.mxu0 0.0
      %776 = vmatprep.subr.mxu0 0.0
      %777 = vmatpush1.msra.mxu0 0.0
      %778 = vmatprep.subr.mxu0 0.0
      %779 = vmatpush1.msra.mxu0 0.0
      %780 = vmatprep.subr.mxu0 0.0
      %781 = vmatpush1.msra.mxu0 0.0
      %782 = vmatprep.mubr.f32.mxu0 0.0
      %783 = vmatmul.mubr.f32.gmra.mrb[0].mxu0 %v154
      %v784 = vpop.f32.mrb[0].mxu0
      %v785 = vadd.f32 0.0, %v784
      %v786 = vpop.f32.mrb[0].mxu0
      %787 = vmatprep.mubr.f32.mxu0 0.0
      %788 = vmatmul.mubr.f32.gmra.mrb[0].mxu0 %v157
      %v789 = vpop.f32.mrb[0].mxu0
      %v790 = vadd.f32 0.0, %v789
      %v791 = vpop.f32.mrb[0].mxu0
      %792 = vdwg.mxu0
      %s793 = scalar_lea.vmem %s147, 112
      %794 = vst [vmem:[%s793] sm:$0xff] %v785
      %795 = vst [vmem:[%s793 + $0x8] sm:$0xff] %v790
      %s796 = smul.u32 8, %s13
      %p797 = scmp.lt.s32.totalorder %s796, 31
      %s798 = scalar_select %p797, %s796, 31
      %s799 = smul.addr %s798, 2
      %s800 = smul.addr %s799, 8
      %s801 = scalar_lea.vmem %s2, %s800
      // Predicated region
      $region29: #{deeplabv3_contrast_forward.5} parent=27 // pred_check
        %p802 = pneg %p78
      $region30: #{deeplabv3_contrast_forward.5} parent=27 // pred_check_branch
        %804 = sbr.rel (%p802) target = $region32
      $region31: #{deeplabv3_contrast_forward.5} parent=27 // pred_region
        %s805 = smul.u32 8, %s13
      $region32: #{deeplabv3_contrast_forward.5} parent=27 // pred_fallthru
        _
    $region28: #{deeplabv3_contrast_forward.5} parent=5 // pred_fallthru
      _
    %p806 = scmp.le.s32.totalorder 2, %s8
    // Predicated region
    $region33: #{deeplabv3_contrast_forward.5} parent=5 // pred_check
      %p807 = pneg %p806
    $region34: #{deeplabv3_contrast_forward.5} parent=5 // pred_check_branch
      %809 = sbr.rel (%p807) target = $region36
    $region35: #{deeplabv3_contrast_forward.5} parent=5 // pred_region
      %s810 = ssub.s32 %s8, 2
      // Predicated region
      $region37: #{deeplabv3_contrast_forward.5} parent=35 // pred_check
        %p811 = pneg %p84
      $region38: #{deeplabv3_contrast_forward.5} parent=35 // pred_check_branch
        %813 = sbr.rel (%p811) target = $region40
      $region39: #{deeplabv3_contrast_forward.5} parent=35 // pred_region
        %s814 = smul.u32 8, %s14
        %p815 = scmp.lt.s32.totalorder %s814, 31
        %s816 = scalar_select %p815, %s814, 31
        %s817 = smul.addr %s816, 2
        %s818 = smul.addr %s817, 8
        %s819 = scalar_lea.vmem %s2, %s818
      $region40: #{deeplabv3_contrast_forward.5} parent=35 // pred_fallthru
        _
    $region36: #{deeplabv3_contrast_forward.5} parent=5 // pred_fallthru
      _
  $region6: #{deeplabv3_contrast_forward.5} parent=0 // loop_footer
    %s12 = sadd.s32 1, %s8
  $region7: #{deeplabv3_contrast_forward.5} parent=0 // loop_footer_branch
    %7 = sbr.rel target = $region3
  $region8: #{deeplabv3_contrast_forward.5} parent=0 // loop_exit
    _

// kernel: deeplabv3_contrast_forward.3
$region0: #{deeplabv3_contrast_forward.3}
  #allocation0 [shape = 'u32[]', space=smem, size = 0x4, offset = 0x4, fixed_abs, tag = 'smem constant byte address 0x4 - core index']
  #allocation1 [shape = 'u32[144,128]{1,0:T(1,128)}', space=vmem, size = 0x12000, scoped, tag = 'internal scratch']
  %s0 = inlined_call_operand.vmem [shape: bf16[128,4], index: 0, kind: input, shape index: {}]
  %s1 = inlined_call_operand.vmem [shape: bf16[4,128], index: 1, kind: input, shape index: {}]
  %s2 = inlined_call_operand.vmem [shape: f32[1,128], index: 2, kind: input, shape index: {}]
  %s3 = inlined_call_operand.vmem [shape: bf16[128,256], index: 3, kind: input, shape index: {}]
  %s4 = inlined_call_operand.vmem [shape: f32[1,256], index: 4, kind: input, shape index: {}]
  %s5 = inlined_call_operand.vmem [shape: bf16[128,128], index: 5, kind: input, shape index: {}]
  %s6 = inlined_call_operand.vmem [shape: f32[128,128], index: 6, kind: output, shape index: {}]
  %s7 = sld [smem:[#allocation0]]
  $region57: #{deeplabv3_contrast_forward.3} parent=0
    _
  %s9 = ssub.s32 1, %s7
  %s10 = scalar_select 0, %s9, %s7
  loop: start=0, step=1, limit=4
  $region2: #{deeplabv3_contrast_forward.3} parent=0 // loop_pre_header
    _
  $region3: #{deeplabv3_contrast_forward.3} parent=0 // loop_header
    %s12 = sphi 0, %s16
    %p13 = scmp.ge.s32.totalorder %s12, 4
    %s22 = sphi 0, %s24
    %s25 = sphi 0, %s22
    %s26 = sphi 0, %s25
    %s42 = sphi 0, %s26
    %s46 = sphi 0, %s46
    %s48 = sphi 0, %s46
    %s49 = sphi 0, %s48
    %s63 = sphi 0, %s49
    %s67 = sphi 0, %s67
    %s69 = sphi 0, %s67
    %s70 = sphi 0, %s69
    %s84 = sphi 0, %s70
    %s88 = sphi 0, %s88
    %s90 = sphi 0, %s88
    %s91 = sphi 0, %s90
    %s105 = sphi 0, %s91
    %s109 = sphi 0, %s109
    %s111 = sphi 0, %s109
    %s112 = sphi 0, %s111
    %s126 = sphi 0, %s112
    %s130 = sphi 0, %s130
    %s132 = sphi 0, %s130
    %s133 = sphi 0, %s132
    %s147 = sphi 0, %s133
    %s153 = sphi 0, %s155
    %s156 = sphi 0, %s153
    %s157 = sphi 0, %s156
    %s173 = sphi 0, %s157
  $region4: #{deeplabv3_contrast_forward.3} parent=0 // loop_header_branch
    %15 = sbr.rel (%p13) target = $region8
  $region5: #{deeplabv3_contrast_forward.3} parent=0 // loop_body
    %s17 = ssub.s32 %s12, 1
    %s18 = ssub.s32 %s12, 2
    %s19 = sadd.s32 %s12, 1
    %s20 = ssub.s32 %s12, %s19
    %p21 = scmp.eq.s32.totalorder %s20, 0
    %s23 = sadd.s32 %s22, 1
    %s24 = scalar_select %p21, %s22, %s23
    %p27 = pneg %p21
    %p28 = scmp.eq.s32.totalorder %s12, 1
    %p29 = por %p27, %p28
    %p30 = scmp.ne.s32.totalorder %s22, %s25
    %p31 = scmp.eq.s32.totalorder %s12, 0
    %p32 = por %p30, %p31
    %p33 = scmp.ne.s32.totalorder %s22, %s25
    %p34 = scmp.eq.s32.totalorder %s17, 1
    %p35 = por %p33, %p34
    %p36 = scmp.ne.s32.totalorder %s25, %s26
    %p37 = scmp.eq.s32.totalorder %s17, 0
    %p38 = por %p36, %p37
    %p39 = scmp.ne.s32.totalorder %s25, %s26
    %p40 = scmp.eq.s32.totalorder %s18, 1
    %p41 = por %p39, %p40
    %p43 = scmp.ne.s32.totalorder %s26, %s42
    %p44 = scmp.eq.s32.totalorder %s18, 0
    %p45 = por %p43, %p44
    %s47 = sadd.s32 %s46, 1
    %p50 = scmp.eq.s32.totalorder %s12, 1
    %p51 = scmp.ne.s32.totalorder %s46, %s48
    %p52 = scmp.eq.s32.totalorder %s12, 0
    %p53 = por %p51, %p52
    %p54 = scmp.ne.s32.totalorder %s46, %s48
    %p55 = scmp.eq.s32.totalorder %s17, 1
    %p56 = por %p54, %p55
    %p57 = scmp.ne.s32.totalorder %s48, %s49
    %p58 = scmp.eq.s32.totalorder %s17, 0
    %p59 = por %p57, %p58
    %p60 = scmp.ne.s32.totalorder %s48, %s49
    %p61 = scmp.eq.s32.totalorder %s18, 1
    %p62 = por %p60, %p61
    %p64 = scmp.ne.s32.totalorder %s49, %s63
    %p65 = scmp.eq.s32.totalorder %s18, 0
    %p66 = por %p64, %p65
    %s68 = sadd.s32 %s67, 1
    %p71 = scmp.eq.s32.totalorder %s12, 1
    %p72 = scmp.ne.s32.totalorder %s67, %s69
    %p73 = scmp.eq.s32.totalorder %s12, 0
    %p74 = por %p72, %p73
    %p75 = scmp.ne.s32.totalorder %s67, %s69
    %p76 = scmp.eq.s32.totalorder %s17, 1
    %p77 = por %p75, %p76
    %p78 = scmp.ne.s32.totalorder %s69, %s70
    %p79 = scmp.eq.s32.totalorder %s17, 0
    %p80 = por %p78, %p79
    %p81 = scmp.ne.s32.totalorder %s69, %s70
    %p82 = scmp.eq.s32.totalorder %s18, 1
    %p83 = por %p81, %p82
    %p85 = scmp.ne.s32.totalorder %s70, %s84
    %p86 = scmp.eq.s32.totalorder %s18, 0
    %p87 = por %p85, %p86
    %s89 = sadd.s32 %s88, 1
    %p92 = scmp.eq.s32.totalorder %s12, 1
    %p93 = scmp.ne.s32.totalorder %s88, %s90
    %p94 = scmp.eq.s32.totalorder %s12, 0
    %p95 = por %p93, %p94
    %p96 = scmp.ne.s32.totalorder %s88, %s90
    %p97 = scmp.eq.s32.totalorder %s17, 1
    %p98 = por %p96, %p97
    %p99 = scmp.ne.s32.totalorder %s90, %s91
    %p100 = scmp.eq.s32.totalorder %s17, 0
    %p101 = por %p99, %p100
    %p102 = scmp.ne.s32.totalorder %s90, %s91
    %p103 = scmp.eq.s32.totalorder %s18, 1
    %p104 = por %p102, %p103
    %p106 = scmp.ne.s32.totalorder %s91, %s105
    %p107 = scmp.eq.s32.totalorder %s18, 0
    %p108 = por %p106, %p107
    %s110 = sadd.s32 %s109, 1
    %p113 = scmp.eq.s32.totalorder %s12, 1
    %p114 = scmp.ne.s32.totalorder %s109, %s111
    %p115 = scmp.eq.s32.totalorder %s12, 0
    %p116 = por %p114, %p115
    %p117 = scmp.ne.s32.totalorder %s109, %s111
    %p118 = scmp.eq.s32.totalorder %s17, 1
    %p119 = por %p117, %p118
    %p120 = scmp.ne.s32.totalorder %s111, %s112
    %p121 = scmp.eq.s32.totalorder %s17, 0
    %p122 = por %p120, %p121
    %p123 = scmp.ne.s32.totalorder %s111, %s112
    %p124 = scmp.eq.s32.totalorder %s18, 1
    %p125 = por %p123, %p124
    %p127 = scmp.ne.s32.totalorder %s112, %s126
    %p128 = scmp.eq.s32.totalorder %s18, 0
    %p129 = por %p127, %p128
    %s131 = sadd.s32 %s130, 1
    %p134 = scmp.eq.s32.totalorder %s12, 1
    %p135 = scmp.ne.s32.totalorder %s130, %s132
    %p136 = scmp.eq.s32.totalorder %s12, 0
    %p137 = por %p135, %p136
    %p138 = scmp.ne.s32.totalorder %s130, %s132
    %p139 = scmp.eq.s32.totalorder %s17, 1
    %p140 = por %p138, %p139
    %p141 = scmp.ne.s32.totalorder %s132, %s133
    %p142 = scmp.eq.s32.totalorder %s17, 0
    %p143 = por %p141, %p142
    %p144 = scmp.ne.s32.totalorder %s132, %s133
    %p145 = scmp.eq.s32.totalorder %s18, 1
    %p146 = por %p144, %p145
    %p148 = scmp.ne.s32.totalorder %s133, %s147
    %p149 = scmp.eq.s32.totalorder %s18, 0
    %p150 = por %p148, %p149
    %s151 = ssub.s32 %s12, %s19
    %p152 = scmp.eq.s32.totalorder %s151, 0
    %s154 = sadd.s32 %s153, 1
    %s155 = scalar_select %p152, %s153, %s154
    %p158 = pneg %p152
    %p159 = scmp.eq.s32.totalorder %s12, 1
    %p160 = por %p158, %p159
    %p161 = scmp.ne.s32.totalorder %s153, %s156
    %p162 = scmp.eq.s32.totalorder %s12, 0
    %p163 = por %p161, %p162
    %p164 = scmp.ne.s32.totalorder %s153, %s156
    %p165 = scmp.eq.s32.totalorder %s17, 1
    %p166 = por %p164, %p165
    %p167 = scmp.ne.s32.totalorder %s156, %s157
    %p168 = scmp.eq.s32.totalorder %s17, 0
    %p169 = por %p167, %p168
    %p170 = scmp.ne.s32.totalorder %s156, %s157
    %p171 = scmp.eq.s32.totalorder %s18, 1
    %p172 = por %p170, %p171
    %p174 = scmp.ne.s32.totalorder %s157, %s173
    %p175 = scmp.eq.s32.totalorder %s18, 0
    %p176 = por %p174, %p175
    %p177 = scmp.le.s32.totalorder 1, %s12
    %p178 = scmp.lt.s32.totalorder %s12, 3
    %p179 = pnand %p177, %p178
    %p180 = pneg %p179
    // Predicated region
    $region9: #{deeplabv3_contrast_forward.3} parent=5 // pred_check
      _
    $region10: #{deeplabv3_contrast_forward.3} parent=5 // pred_check_branch
      %182 = sbr.rel (%p179) target = $region12
    $region11: #{deeplabv3_contrast_forward.3} parent=5 // pred_region
      %s183 = ssub.s32 %s12, 1
      // Predicated region
      $region13: #{deeplabv3_contrast_forward.3} parent=11 // pred_check
        %p184 = pneg %p59
      $region14: #{deeplabv3_contrast_forward.3} parent=11 // pred_check_branch
        %186 = sbr.rel (%p184) target = $region16
      $region15: #{deeplabv3_contrast_forward.3} parent=11 // pred_region
        _
      $region16: #{deeplabv3_contrast_forward.3} parent=11 // pred_fallthru
        _
      // Predicated region
      $region17: #{deeplabv3_contrast_forward.3} parent=11 // pred_check
        %p187 = pneg %p80
      $region18: #{deeplabv3_contrast_forward.3} parent=11 // pred_check_branch
        %189 = sbr.rel (%p187) target = $region20
      $region19: #{deeplabv3_contrast_forward.3} parent=11 // pred_region
        _
      $region20: #{deeplabv3_contrast_forward.3} parent=11 // pred_fallthru
        _
      // Predicated region
      $region21: #{deeplabv3_contrast_forward.3} parent=11 // pred_check
        %p190 = pneg %p101
      $region22: #{deeplabv3_contrast_forward.3} parent=11 // pred_check_branch
        %192 = sbr.rel (%p190) target = $region24
      $region23: #{deeplabv3_contrast_forward.3} parent=11 // pred_region
        _
      $region24: #{deeplabv3_contrast_forward.3} parent=11 // pred_fallthru
        _
      // Predicated region
      $region25: #{deeplabv3_contrast_forward.3} parent=11 // pred_check
        %p193 = pneg %p122
      $region26: #{deeplabv3_contrast_forward.3} parent=11 // pred_check_branch
        %195 = sbr.rel (%p193) target = $region28
      $region27: #{deeplabv3_contrast_forward.3} parent=11 // pred_region
        _
      $region28: #{deeplabv3_contrast_forward.3} parent=11 // pred_fallthru
        _
      // Predicated region
      $region29: #{deeplabv3_contrast_forward.3} parent=11 // pred_check
        %p196 = pneg %p143
      $region30: #{deeplabv3_contrast_forward.3} parent=11 // pred_check_branch
        %198 = sbr.rel (%p196) target = $region32
      $region31: #{deeplabv3_contrast_forward.3} parent=11 // pred_region
        _
      $region32: #{deeplabv3_contrast_forward.3} parent=11 // pred_fallthru
        _
    $region12: #{deeplabv3_contrast_forward.3} parent=5 // pred_fallthru
      _
    %p199 = scmp.lt.s32.totalorder %s12, 2
    // Predicated region
    $region33: #{deeplabv3_contrast_forward.3} parent=5 // pred_check
      %p200 = pneg %p199
    $region34: #{deeplabv3_contrast_forward.3} parent=5 // pred_check_branch
      %202 = sbr.rel (%p200) target = $region36
    $region35: #{deeplabv3_contrast_forward.3} parent=5 // pred_region
      // Predicated region
      $region37: #{deeplabv3_contrast_forward.3} parent=35 // pred_check
        %p203 = pneg %p32
      $region38: #{deeplabv3_contrast_forward.3} parent=35 // pred_check_branch
        %205 = sbr.rel (%p203) target = $region40
      $region39: #{deeplabv3_contrast_forward.3} parent=35 // pred_region
        %s206 = smul.u32 8, %s12
        %p207 = scmp.lt.s32.totalorder %s206, 15
        %s208 = scalar_select %p207, %s206, 15
        %s209 = smul.addr %s208, 4
        %s210 = scalar_lea.vmem %s0, %s209
        %s211 = smul.u32 8, %s12
      $region40: #{deeplabv3_contrast_forward.3} parent=35 // pred_fallthru
        _
    $region36: #{deeplabv3_contrast_forward.3} parent=5 // pred_fallthru
      _
    %p212 = scmp.le.s32.totalorder 1, %s12
    %p213 = scmp.lt.s32.totalorder %s12, 3
    %p214 = pnand %p212, %p213
    %p215 = pneg %p214
    // Predicated region
    $region41: #{deeplabv3_contrast_forward.3} parent=5 // pred_check
      _
    $region42: #{deeplabv3_contrast_forward.3} parent=5 // pred_check_branch
      %217 = sbr.rel (%p214) target = $region44
    $region43: #{deeplabv3_contrast_forward.3} parent=5 // pred_region
      %s218 = ssub.s32 %s12, 1
      %s219 = smul.u32 8, %s17
      %p220 = scmp.lt.s32.totalorder %s219, 15
      %s221 = scalar_select %p220, %s219, 15
      %s222 = smul.addr %s221, 4
      %s223 = scalar_lea.vmem %s0, %s222
      %p224 = pneg %p38
      %p225 = pneg %p35
      %p226 = pneg %p59
      %p227 = pneg %p56
      %p228 = pneg %p80
      %p229 = pneg %p77
      %p230 = pneg %p101
      %p231 = pneg %p98
      %p232 = pneg %p122
      %p233 = pneg %p119
      %p234 = pneg %p143
      %p235 = pneg %p140
      %p236 = pneg %p169
      %p237 = pneg %p166
      %s238 = smul.u32 8, %s17
      %p239 = scmp.lt.s32.totalorder %s238, 15
      %s240 = scalar_select %p239, %s238, 15
      %s241 = smul.addr %s240, 8
      %s242 = scalar_lea.vmem %s6, %s241
      %s243 = smul.u32 8, %s17
      %p244 = scmp.lt.s32.totalorder %s243, 15
      %s245 = scalar_select %p244, %s243, 15
      %s246 = smul.addr %s245, 4
      %s247 = scalar_lea.vmem %s0, %s246
      %s248 = smul.u32 8, %s17
      %s249 = smul.u32 8, %s17
      %p250 = scmp.lt.s32.totalorder %s249, 15
      %s251 = scalar_select %p250, %s249, 15
      %s252 = smul.addr %s251, 8
      %s253 = scalar_lea.vmem %s6, %s252
      %s254 = smul.u32 8, %s17
      %v256 = vld [vmem:[%s247] sm:$0xf]
      %v257 = vld [vmem:[%s247 + $0x4] sm:$0xf]
      %v258 = vld [vmem:[%s247 + $0x8] sm:$0xf]
      %v259 = vld [vmem:[%s247 + $0xc] sm:$0xf]
      %v260 = vld [vmem:[%s247 + $0x10] sm:$0xf]
      %v261 = vld [vmem:[%s247 + $0x14] sm:$0xf]
      %v262 = vld [vmem:[%s247 + $0x18] sm:$0xf]
      %v263 = vld [vmem:[%s247 + $0x1c] sm:$0xf]
      %v264 = vld [vmem:[%s1] sm:$0x3]
      %v265 = vld [vmem:[%s2] sm:$0x1]
      %v267 = vlaneseq
      %v268 = vshrl.u32 %v267, 7
      %v269 = vsub.s32 0, %v268
      %v270 = vrot.slane %v265, %v269
      %v280 = vunpack.c.l.b16 %v256
      %v281 = vunpack.c.l.b16 %v257
      %v282 = vunpack.c.l.b16 %v258
      %v283 = vunpack.c.l.b16 %v259
      %v284 = vunpack.c.l.b16 %v260
      %v285 = vunpack.c.l.b16 %v261
      %v286 = vunpack.c.l.b16 %v262
      %v287 = vunpack.c.l.b16 %v263
      %v288 = vpack.c.b16 %v281, %v280
      %v289 = vpack.c.b16 %v283, %v282
      %v290 = vpack.c.b16 %v285, %v284
      %v291 = vpack.c.b16 %v287, %v286
      %vm292 = vcmask 31744
      %v294 = vsel %vm292, %v288, 0
      %v297 = vsel %vm292, %v289, 0
      %v300 = vsel %vm292, %v290, 0
      %v303 = vsel %vm292, %v291, 0
      %vm305 = vcmask 1041408
      %v307 = vsel %vm305, %v264, 0
      %309 = vmatprep.subr.bf16.mxu0 0
      %310 = vmatpush1.bf16.msra.mxu0 %v307
      %311 = vmatprep.subr.bf16.mxu0 0
      %312 = vmatpush1.bf16.msra.mxu0 0
      %313 = vmatprep.subr.bf16.mxu0 0
      %314 = vmatpush1.bf16.msra.mxu0 0
      %315 = vmatprep.subr.bf16.mxu0 0
      %316 = vmatpush1.bf16.msra.mxu0 0
      %317 = vmatprep.subr.bf16.mxu0 0
      %318 = vmatpush1.bf16.msra.mxu0 0
      %319 = vmatprep.subr.bf16.mxu0 0
      %320 = vmatpush1.bf16.msra.mxu0 0
      %321 = vmatprep.subr.bf16.mxu0 0
      %322 = vmatpush1.bf16.msra.mxu0 0
      %323 = vmatprep.subr.bf16.mxu0 0
      %324 = vmatpush1.bf16.msra.mxu0 0
      %325 = vmatprep.subr.bf16.mxu0 0
      %326 = vmatpush1.bf16.msra.mxu0 0
      %327 = vmatprep.subr.bf16.mxu0 0
      %328 = vmatpush1.bf16.msra.mxu0 0
      %329 = vmatprep.subr.bf16.mxu0 0
      %330 = vmatpush1.bf16.msra.mxu0 0
      %331 = vmatprep.subr.bf16.mxu0 0
      %332 = vmatpush1.bf16.msra.mxu0 0
      %333 = vmatprep.subr.bf16.mxu0 0
      %334 = vmatpush1.bf16.msra.mxu0 0
      %335 = vmatprep.subr.bf16.mxu0 0
      %336 = vmatpush1.bf16.msra.mxu0 0
      %337 = vmatprep.subr.bf16.mxu0 0
      %338 = vmatpush1.bf16.msra.mxu0 0
      %339 = vmatprep.subr.bf16.mxu0 0
      %340 = vmatpush1.bf16.msra.mxu0 0
      %341 = vmatprep.mubr.bf16.mxu0 0
      %342 = vmatmul.mubr.bf16.gmra.mrb[0].mxu0 %v294
      %v343 = vpop.f32.mrb[0].mxu0
      %v344 = vadd.f32 %v270, %v343
      %v345 = vpop.f32.mrb[0].mxu0
      %v346 = vpop.f32.mrb[0].mxu0
      %v347 = vadd.f32 %v270, %v346
      %v348 = vpop.f32.mrb[0].mxu0
      %349 = vmatprep.mubr.bf16.mxu0 0
      %350 = vmatmul.mubr.bf16.gmra.mrb[0].mxu0 %v297
      %v351 = vpop.f32.mrb[0].mxu0
      %v352 = vadd.f32 %v270, %v351
      %v353 = vpop.f32.mrb[0].mxu0
      %v354 = vpop.f32.mrb[0].mxu0
      %v355 = vadd.f32 %v270, %v354
      %v356 = vpop.f32.mrb[0].mxu0
      %357 = vmatprep.mubr.bf16.mxu0 0
      %358 = vmatmul.mubr.bf16.gmra.mrb[0].mxu0 %v300
      %v359 = vpop.f32.mrb[0].mxu0
      %v360 = vadd.f32 %v270, %v359
      %v361 = vpop.f32.mrb[0].mxu0
      %v362 = vpop.f32.mrb[0].mxu0
      %v363 = vadd.f32 %v270, %v362
      %v364 = vpop.f32.mrb[0].mxu0
      %365 = vmatprep.mubr.bf16.mxu0 0
      %366 = vmatmul.mubr.bf16.gmra.mrb[0].mxu0 %v303
      %v367 = vpop.f32.mrb[0].mxu0
      %v368 = vadd.f32 %v270, %v367
      %v369 = vpop.f32.mrb[0].mxu0
      %v370 = vpop.f32.mrb[0].mxu0
      %v371 = vadd.f32 %v270, %v370
      %v372 = vpop.f32.mrb[0].mxu0
      %373 = vdwg.mxu0
      %v374 = vmax.f32 %v344, 0.0
      %v375 = vmax.f32 %v347, 0.0
      %v376 = vmax.f32 %v352, 0.0
      %v377 = vmax.f32 %v355, 0.0
      %v378 = vmax.f32 %v360, 0.0
      %v379 = vmax.f32 %v363, 0.0
      %v380 = vmax.f32 %v368, 0.0
      %v381 = vmax.f32 %v371, 0.0
      %v382 = vpack.c.bf16 %v375, %v374
      %v383 = vpack.c.bf16 %v377, %v376
      %v384 = vpack.c.bf16 %v379, %v378
      %v385 = vpack.c.bf16 %v381, %v380
      %v386 = vld [vmem:[%s3] sm:$0xff]
      %v387 = vld [vmem:[%s3 + $0x8] sm:$0xff]
      %v388 = vld [vmem:[%s3 + $0x10] sm:$0xff]
      %v389 = vld [vmem:[%s3 + $0x18] sm:$0xff]
      %v390 = vld [vmem:[%s3 + $0x20] sm:$0xff]
      %v391 = vld [vmem:[%s3 + $0x28] sm:$0xff]
      %v392 = vld [vmem:[%s3 + $0x30] sm:$0xff]
      %v393 = vld [vmem:[%s3 + $0x38] sm:$0xff]
      %v394 = vld [vmem:[%s3 + $0x40] sm:$0xff]
      %v395 = vld [vmem:[%s3 + $0x48] sm:$0xff]
      %v396 = vld [vmem:[%s3 + $0x50] sm:$0xff]
      %v397 = vld [vmem:[%s3 + $0x58] sm:$0xff]
      %v398 = vld [vmem:[%s3 + $0x60] sm:$0xff]
      %v399 = vld [vmem:[%s3 + $0x68] sm:$0xff]
      %v400 = vld [vmem:[%s3 + $0x70] sm:$0xff]
      %v401 = vld [vmem:[%s3 + $0x78] sm:$0xff]
      %v402 = vld [vmem:[%s4] sm:$0x3]
      %v404 = vlaneseq
      %v405 = vshrl.u32 %v404, 7
      %v406 = vsub.s32 0, %v405
      %v407 = vrot.slane %v402, %v406
      %v408 = vlaneseq
      %v409 = vshrl.u32 %v408, 7
      %v410 = vsub.s32 1, %v409
      %v411 = vrot.slane %v402, %v410
      %v430 = vunpack.c.l.b16 %v386
      %v431 = vunpack.c.h.b16 %v386
      %v432 = vunpack.c.l.b16 %v387
      %v433 = vunpack.c.h.b16 %v387
      %v434 = vunpack.c.l.b16 %v388
      %v435 = vunpack.c.h.b16 %v388
      %v436 = vunpack.c.l.b16 %v389
      %v437 = vunpack.c.h.b16 %v389
      %v438 = vunpack.c.l.b16 %v390
      %v439 = vunpack.c.h.b16 %v390
      %v440 = vunpack.c.l.b16 %v391
      %v441 = vunpack.c.h.b16 %v391
      %v442 = vunpack.c.l.b16 %v392
      %v443 = vunpack.c.h.b16 %v392
      %v444 = vunpack.c.l.b16 %v393
      %v445 = vunpack.c.h.b16 %v393
      %v446 = vunpack.c.l.b16 %v394
      %v447 = vunpack.c.h.b16 %v394
      %v448 = vunpack.c.l.b16 %v395
      %v449 = vunpack.c.h.b16 %v395
      %v450 = vunpack.c.l.b16 %v396
      %v451 = vunpack.c.h.b16 %v396
      %v452 = vunpack.c.l.b16 %v397
      %v453 = vunpack.c.h.b16 %v397
      %v454 = vunpack.c.l.b16 %v398
      %v455 = vunpack.c.h.b16 %v398
      %v456 = vunpack.c.l.b16 %v399
      %v457 = vunpack.c.h.b16 %v399
      %v458 = vunpack.c.l.b16 %v400
      %v459 = vunpack.c.h.b16 %v400
      %v460 = vunpack.c.l.b16 %v401
      %v461 = vunpack.c.h.b16 %v401
      %v462 = vpack.c.b16 %v432, %v430
      %v463 = vpack.c.b16 %v433, %v431
      %v464 = vpack.c.b16 %v436, %v434
      %v465 = vpack.c.b16 %v437, %v435
      %v466 = vpack.c.b16 %v440, %v438
      %v467 = vpack.c.b16 %v441, %v439
      %v468 = vpack.c.b16 %v444, %v442
      %v469 = vpack.c.b16 %v445, %v443
      %v470 = vpack.c.b16 %v448, %v446
      %v471 = vpack.c.b16 %v449, %v447
      %v472 = vpack.c.b16 %v452, %v450
      %v473 = vpack.c.b16 %v453, %v451
      %v474 = vpack.c.b16 %v456, %v454
      %v475 = vpack.c.b16 %v457, %v455
      %v476 = vpack.c.b16 %v460, %v458
      %v477 = vpack.c.b16 %v461, %v459
      %494 = vmatprep.subr.bf16.mxu0 %v463
      %495 = vmatpush1.bf16.msra.mxu0 %v462
      %496 = vmatprep.subr.bf16.mxu0 %v465
      %497 = vmatpush1.bf16.msra.mxu0 %v464
      %498 = vmatprep.subr.bf16.mxu0 %v467
      %499 = vmatpush1.bf16.msra.mxu0 %v466
      %500 = vmatprep.subr.bf16.mxu0 %v469
      %501 = vmatpush1.bf16.msra.mxu0 %v468
      %502 = vmatprep.subr.bf16.mxu0 %v471
      %503 = vmatpush1.bf16.msra.mxu0 %v470
      %504 = vmatprep.subr.bf16.mxu0 %v473
      %505 = vmatpush1.bf16.msra.mxu0 %v472
      %506 = vmatprep.subr.bf16.mxu0 %v475
      %507 = vmatpush1.bf16.msra.mxu0 %v474
      %508 = vmatprep.subr.bf16.mxu0 %v477
      %509 = vmatpush1.bf16.msra.mxu0 %v476
      %510 = vmatprep.subr.bf16.mxu0 0
      %511 = vmatpush1.bf16.msra.mxu0 0
      %512 = vmatprep.subr.bf16.mxu0 0
      %513 = vmatpush1.bf16.msra.mxu0 0
      %514 = vmatprep.subr.bf16.mxu0 0
      %515 = vmatpush1.bf16.msra.mxu0 0
      %516 = vmatprep.subr.bf16.mxu0 0
      %517 = vmatpush1.bf16.msra.mxu0 0
      %518 = vmatprep.subr.bf16.mxu0 0
      %519 = vmatpush1.bf16.msra.mxu0 0
      %520 = vmatprep.subr.bf16.mxu0 0
      %521 = vmatpush1.bf16.msra.mxu0 0
      %522 = vmatprep.subr.bf16.mxu0 0
      %523 = vmatpush1.bf16.msra.mxu0 0
      %524 = vmatprep.subr.bf16.mxu0 0
      %525 = vmatpush1.bf16.msra.mxu0 0
      %526 = vmatprep.mubr.bf16.mxu0 0
      %527 = vmatmul.mubr.bf16.gmra.mrb[0].mxu0 %v382
      %v528 = vpop.f32.mrb[0].mxu0
      %v529 = vadd.f32 %v407, %v528
      %v530 = vpop.f32.mrb[0].mxu0
      %v531 = vadd.f32 %v411, %v530
      %v532 = vpop.f32.mrb[0].mxu0
      %v533 = vadd.f32 %v407, %v532
      %v534 = vpop.f32.mrb[0].mxu0
      %v535 = vadd.f32 %v411, %v534
      %536 = vmatprep.mubr.bf16.mxu0 0
      %537 = vmatmul.mubr.bf16.gmra.mrb[0].mxu0 %v383
      %v538 = vpop.f32.mrb[0].mxu0
      %v539 = vadd.f32 %v407, %v538
      %v540 = vpop.f32.mrb[0].mxu0
      %v541 = vadd.f32 %v411, %v540
      %v542 = vpop.f32.mrb[0].mxu0
      %v543 = vadd.f32 %v407, %v542
      %v544 = vpop.f32.mrb[0].mxu0
      %v545 = vadd.f32 %v411, %v544
      %546 = vmatprep.mubr.bf16.mxu0 0
      %547 = vmatmul.mubr.bf16.gmra.mrb[0].mxu0 %v384
      %v548 = vpop.f32.mrb[0].mxu0
      %v549 = vadd.f32 %v407, %v548
      %v550 = vpop.f32.mrb[0].mxu0
      %v551 = vadd.f32 %v411, %v550
      %v552 = vpop.f32.mrb[0].mxu0
      %v553 = vadd.f32 %v407, %v552
      %v554 = vpop.f32.mrb[0].mxu0
      %v555 = vadd.f32 %v411, %v554
      %556 = vmatprep.mubr.bf16.mxu0 0
      %557 = vmatmul.mubr.bf16.gmra.mrb[0].mxu0 %v385
      %v558 = vpop.f32.mrb[0].mxu0
      %v559 = vadd.f32 %v407, %v558
      %v560 = vpop.f32.mrb[0].mxu0
      %v561 = vadd.f32 %v411, %v560
      %v562 = vpop.f32.mrb[0].mxu0
      %v563 = vadd.f32 %v407, %v562
      %v564 = vpop.f32.mrb[0].mxu0
      %v565 = vadd.f32 %v411, %v564
      %566 = vdwg.mxu0
      %v567 = vmax.f32 %v529, 0.0
      %v568 = vmax.f32 %v533, 0.0
      %v569 = vmax.f32 %v539, 0.0
      %v570 = vmax.f32 %v543, 0.0
      %v571 = vmax.f32 %v549, 0.0
      %v572 = vmax.f32 %v553, 0.0
      %v573 = vmax.f32 %v559, 0.0
      %v574 = vmax.f32 %v563, 0.0
      %v575 = vpack.c.bf16 %v568, %v567
      %v576 = vpack.c.bf16 %v570, %v569
      %v577 = vpack.c.bf16 %v572, %v571
      %v578 = vpack.c.bf16 %v574, %v573
      %v579 = vld [vmem:[%s5] sm:$0xf]
      %v580 = vld [vmem:[%s5 + $0x4] sm:$0xf]
      %v581 = vld [vmem:[%s5 + $0x8] sm:$0xf]
      %v582 = vld [vmem:[%s5 + $0xc] sm:$0xf]
      %v583 = vld [vmem:[%s5 + $0x10] sm:$0xf]
      %v584 = vld [vmem:[%s5 + $0x14] sm:$0xf]
      %v585 = vld [vmem:[%s5 + $0x18] sm:$0xf]
      %v586 = vld [vmem:[%s5 + $0x1c] sm:$0xf]
      %v587 = vld [vmem:[%s5 + $0x20] sm:$0xf]
      %v588 = vld [vmem:[%s5 + $0x24] sm:$0xf]
      %v589 = vld [vmem:[%s5 + $0x28] sm:$0xf]
      %v590 = vld [vmem:[%s5 + $0x2c] sm:$0xf]
      %v591 = vld [vmem:[%s5 + $0x30] sm:$0xf]
      %v592 = vld [vmem:[%s5 + $0x34] sm:$0xf]
      %v593 = vld [vmem:[%s5 + $0x38] sm:$0xf]
      %v594 = vld [vmem:[%s5 + $0x3c] sm:$0xf]
      %v611 = vunpack.c.l.b16 %v579
      %v612 = vunpack.c.l.b16 %v580
      %v613 = vunpack.c.l.b16 %v581
      %v614 = vunpack.c.l.b16 %v582
      %v615 = vunpack.c.l.b16 %v583
      %v616 = vunpack.c.l.b16 %v584
      %v617 = vunpack.c.l.b16 %v585
      %v618 = vunpack.c.l.b16 %v586
      %v619 = vunpack.c.l.b16 %v587
      %v620 = vunpack.c.l.b16 %v588
      %v621 = vunpack.c.l.b16 %v589
      %v622 = vunpack.c.l.b16 %v590
      %v623 = vunpack.c.l.b16 %v591
      %v624 = vunpack.c.l.b16 %v592
      %v625 = vunpack.c.l.b16 %v593
      %v626 = vunpack.c.l.b16 %v594
      %v627 = vpack.c.b16 %v612, %v611
      %v628 = vpack.c.b16 %v614, %v613
      %v629 = vpack.c.b16 %v616, %v615
      %v630 = vpack.c.b16 %v618, %v617
      %v631 = vpack.c.b16 %v620, %v619
      %v632 = vpack.c.b16 %v622, %v621
      %v633 = vpack.c.b16 %v624, %v623
      %v634 = vpack.c.b16 %v626, %v625
      %643 = vmatprep.subr.bf16.mxu0 0
      %644 = vmatpush1.bf16.msra.mxu0 %v627
      %645 = vmatprep.subr.bf16.mxu0 0
      %646 = vmatpush1.bf16.msra.mxu0 %v628
      %647 = vmatprep.subr.bf16.mxu0 0
      %648 = vmatpush1.bf16.msra.mxu0 %v629
      %649 = vmatprep.subr.bf16.mxu0 0
      %650 = vmatpush1.bf16.msra.mxu0 %v630
      %651 = vmatprep.subr.bf16.mxu0 0
      %652 = vmatpush1.bf16.msra.mxu0 %v631
      %653 = vmatprep.subr.bf16.mxu0 0
      %654 = vmatpush1.bf16.msra.mxu0 %v632
      %655 = vmatprep.subr.bf16.mxu0 0
      %656 = vmatpush1.bf16.msra.mxu0 %v633
      %657 = vmatprep.subr.bf16.mxu0 0
      %658 = vmatpush1.bf16.msra.mxu0 %v634
      %659 = vmatprep.subr.bf16.mxu0 0
      %660 = vmatpush1.bf16.msra.mxu0 0
      %661 = vmatprep.subr.bf16.mxu0 0
      %662 = vmatpush1.bf16.msra.mxu0 0
      %663 = vmatprep.subr.bf16.mxu0 0
      %664 = vmatpush1.bf16.msra.mxu0 0
      %665 = vmatprep.subr.bf16.mxu0 0
      %666 = vmatpush1.bf16.msra.mxu0 0
      %667 = vmatprep.subr.bf16.mxu0 0
      %668 = vmatpush1.bf16.msra.mxu0 0
      %669 = vmatprep.subr.bf16.mxu0 0
      %670 = vmatpush1.bf16.msra.mxu0 0
      %671 = vmatprep.subr.bf16.mxu0 0
      %672 = vmatpush1.bf16.msra.mxu0 0
      %673 = vmatprep.subr.bf16.mxu0 0
      %674 = vmatpush1.bf16.msra.mxu0 0
      %675 = vmatprep.mubr.bf16.mxu0 0
      %676 = vmatmul.mubr.bf16.gmra.mrb[0].mxu0 %v575
      %v677 = vpop.f32.mrb[0].mxu0
      %v678 = vadd.f32 0.0, %v677
      %v679 = vpop.f32.mrb[0].mxu0
      %v680 = vpop.f32.mrb[0].mxu0
      %v681 = vadd.f32 0.0, %v680
      %v682 = vpop.f32.mrb[0].mxu0
      %683 = vmatprep.mubr.bf16.mxu0 0
      %684 = vmatmul.mubr.bf16.gmra.mrb[0].mxu0 %v576
      %v685 = vpop.f32.mrb[0].mxu0
      %v686 = vadd.f32 0.0, %v685
      %v687 = vpop.f32.mrb[0].mxu0
      %v688 = vpop.f32.mrb[0].mxu0
      %v689 = vadd.f32 0.0, %v688
      %v690 = vpop.f32.mrb[0].mxu0
      %691 = vmatprep.mubr.bf16.mxu0 0
      %692 = vmatmul.mubr.bf16.gmra.mrb[0].mxu0 %v577
      %v693 = vpop.f32.mrb[0].mxu0
      %v694 = vadd.f32 0.0, %v693
      %v695 = vpop.f32.mrb[0].mxu0
      %v696 = vpop.f32.mrb[0].mxu0
      %v697 = vadd.f32 0.0, %v696
      %v698 = vpop.f32.mrb[0].mxu0
      %699 = vmatprep.mubr.bf16.mxu0 0
      %700 = vmatmul.mubr.bf16.gmra.mrb[0].mxu0 %v578
      %v701 = vpop.f32.mrb[0].mxu0
      %v702 = vadd.f32 0.0, %v701
      %v703 = vpop.f32.mrb[0].mxu0
      %v704 = vpop.f32.mrb[0].mxu0
      %v705 = vadd.f32 0.0, %v704
      %v706 = vpop.f32.mrb[0].mxu0
      %707 = vdwg.mxu0
      %v708 = vmul.f32 %v678, %v678
      %v709 = vmul.f32 %v681, %v681
      %v710 = vmul.f32 %v686, %v686
      %v711 = vmul.f32 %v689, %v689
      %v712 = vmul.f32 %v694, %v694
      %v713 = vmul.f32 %v697, %v697
      %v714 = vmul.f32 %v702, %v702
      %v715 = vmul.f32 %v705, %v705
      %716 = vadd.xlane.f32.xlu0 %v708
      %v717 = vpop.xlane.xlu0 %716
      %718 = vadd.xlane.f32.xlu0 %v709
      %v719 = vpop.xlane.xlu0 %718
      %720 = vadd.xlane.f32.xlu0 %v710
      %v721 = vpop.xlane.xlu0 %720
      %722 = vadd.xlane.f32.xlu0 %v711
      %v723 = vpop.xlane.xlu0 %722
      %724 = vadd.xlane.f32.xlu0 %v712
      %v725 = vpop.xlane.xlu0 %724
      %726 = vadd.xlane.f32.xlu0 %v713
      %v727 = vpop.xlane.xlu0 %726
      %728 = vadd.xlane.f32.xlu0 %v714
      %v729 = vpop.xlane.xlu0 %728
      %730 = vadd.xlane.f32.xlu0 %v715
      %v731 = vpop.xlane.xlu0 %730
      %v732 = vmax.f32 %v717, 1e-24
      %v733 = vmax.f32 %v719, 1e-24
      %v734 = vmax.f32 %v721, 1e-24
      %v735 = vmax.f32 %v723, 1e-24
      %v736 = vmax.f32 %v725, 1e-24
      %v737 = vmax.f32 %v727, 1e-24
      %v738 = vmax.f32 %v729, 1e-24
      %v739 = vmax.f32 %v731, 1e-24
      %v740 = vrsqrt.pop %v732
      %v741 = vrsqrt.pop %v733
      %v742 = vrsqrt.pop %v734
      %v743 = vrsqrt.pop %v735
      %v744 = vrsqrt.pop %v736
      %v745 = vrsqrt.pop %v737
      %v746 = vrsqrt.pop %v738
      %v747 = vrsqrt.pop %v739
      %v748 = vmul.f32 %v678, %v740
      %v749 = vmul.f32 %v681, %v741
      %v750 = vmul.f32 %v686, %v742
      %v751 = vmul.f32 %v689, %v743
      %v752 = vmul.f32 %v694, %v744
      %v753 = vmul.f32 %v697, %v745
      %v754 = vmul.f32 %v702, %v746
      %v755 = vmul.f32 %v705, %v747
      %v756 = vadd.f32 %v531, %v748
      %v757 = vadd.f32 %v535, %v749
      %v758 = vadd.f32 %v541, %v750
      %v759 = vadd.f32 %v545, %v751
      %v760 = vadd.f32 %v551, %v752
      %v761 = vadd.f32 %v555, %v753
      %v762 = vadd.f32 %v561, %v754
      %v763 = vadd.f32 %v565, %v755
      %764 = vst [vmem:[%s253] sm:$0xff] %v756
      %765 = vst [vmem:[%s253 + $0x8] sm:$0xff] %v757
      %766 = vst [vmem:[%s253 + $0x10] sm:$0xff] %v758
      %767 = vst [vmem:[%s253 + $0x18] sm:$0xff] %v759
      %768 = vst [vmem:[%s253 + $0x20] sm:$0xff] %v760
      %769 = vst [vmem:[%s253 + $0x28] sm:$0xff] %v761
      %770 = vst [vmem:[%s253 + $0x30] sm:$0xff] %v762
      %771 = vst [vmem:[%s253 + $0x38] sm:$0xff] %v763
      %s772 = smul.u32 8, %s17
      %p773 = scmp.lt.s32.totalorder %s772, 15
      %s774 = scalar_select %p773, %s772, 15
      %s775 = smul.addr %s774, 8
      %s776 = scalar_lea.vmem %s6, %s775
      // Predicated region
      $region45: #{deeplabv3_contrast_forward.3} parent=43 // pred_check
        %p777 = pneg %p166
      $region46: #{deeplabv3_contrast_forward.3} parent=43 // pred_check_branch
        %779 = sbr.rel (%p777) target = $region48
      $region47: #{deeplabv3_contrast_forward.3} parent=43 // pred_region
        %s780 = smul.u32 8, %s17
      $region48: #{deeplabv3_contrast_forward.3} parent=43 // pred_fallthru
        _
    $region44: #{deeplabv3_contrast_forward.3} parent=5 // pred_fallthru
      _
    %p781 = scmp.le.s32.totalorder 2, %s12
    // Predicated region
    $region49: #{deeplabv3_contrast_forward.3} parent=5 // pred_check
      %p782 = pneg %p781
    $region50: #{deeplabv3_contrast_forward.3} parent=5 // pred_check_branch
      %784 = sbr.rel (%p782) target = $region52
    $region51: #{deeplabv3_contrast_forward.3} parent=5 // pred_region
      %s785 = ssub.s32 %s12, 2
      // Predicated region
      $region53: #{deeplabv3_contrast_forward.3} parent=51 // pred_check
        %p786 = pneg %p172
      $region54: #{deeplabv3_contrast_forward.3} parent=51 // pred_check_branch
        %788 = sbr.rel (%p786) target = $region56
      $region55: #{deeplabv3_contrast_forward.3} parent=51 // pred_region
        %s789 = smul.u32 8, %s18
        %p790 = scmp.lt.s32.totalorder %s789, 15
        %s791 = scalar_select %p790, %s789, 15
        %s792 = smul.addr %s791, 8
        %s793 = scalar_lea.vmem %s6, %s792
      $region56: #{deeplabv3_contrast_forward.3} parent=51 // pred_fallthru
        _
    $region52: #{deeplabv3_contrast_forward.3} parent=5 // pred_fallthru
      _
  $region6: #{deeplabv3_contrast_forward.3} parent=0 // loop_footer
    %s16 = sadd.s32 1, %s12
  $region7: #{deeplabv3_contrast_forward.3} parent=0 // loop_footer_branch
    %11 = sbr.rel target = $region3
  $region8: #{deeplabv3_contrast_forward.3} parent=0 // loop_exit
    _

</llo_original>
